<compile_context>
chip_gen: v7x
topology: tpu7x:2x2x1
jax: 0.10.0
libtpu: 0.0.40
codegen_flags: <defaults>
</compile_context>

<pallas_src>
import functools

import jax
import jax.numpy as jnp
from jax.experimental import pallas as pl
from jax.experimental.pallas import tpu as pltpu


# ----------------------------------------------------------------------------
# Fused Pallas kernel: encoder + GAP + attention + classification head
# ----------------------------------------------------------------------------

def _fused_kernel(x_ref,                         # [1, HW, Cin]  bf16
                  enc_w_ref, enc_b_ref,          # [Cin, hid] bf16, [1, hid] f32
                  enc_wg_ref,                    # [hid, hid] bf16
                  attn_v_ref,                    # [2, hid]   bf16
                  wr_ref, br_ref,                # projection_region (transposed)
                  wg_ref, bg_ref,                # projection_global (transposed)
                  w1r_ref, w1g_ref, b1_ref,      # fc1 split [.., :256] / [.., 256:]
                  wo_ref, bo_ref,                # output (transposed, lane-padded)
                  out_ref,                       # [1, 1, NC_PAD] f32
                  attn_ref,                      # [1, 2, HW]     f32
                  *, hw):
    x = x_ref[0]                                                     # [HW, Cin] bf16

    # --- synthetic encoder: 1x1 conv + ReLU (f32 accumulate, f32 epilogue) ---
    f_r = jnp.dot(x, enc_w_ref[...], preferred_element_type=jnp.float32) + enc_b_ref[...]
    f_r = jnp.maximum(f_r, 0.0)                                      # [HW, hid] f32 (VMEM-resident)
    f_r_bf = f_r.astype(jnp.bfloat16)

    # --- AdaptiveAvgPool2d(1): GAP as an MXU ones-dot (mean over spatial) ---
    ones_row = jnp.full((1, hw), 1.0 / hw, jnp.bfloat16)
    g_mean = jnp.dot(ones_row, f_r_bf, preferred_element_type=jnp.float32)   # [1, hid]
    g_mean_bf = g_mean.astype(jnp.bfloat16)

    # --- synthetic global branch ---
    f_g = jnp.dot(g_mean_bf, enc_wg_ref[...], preferred_element_type=jnp.float32)  # [1, hid]

    # --- attention maps: logits [2, HW] (lane-dense), softmax over spatial ---
    logits = jnp.dot(attn_v_ref[...], f_r_bf.T,
                     preferred_element_type=jnp.float32)             # [2, HW]
    m = jnp.max(logits, axis=-1, keepdims=True)
    p = jnp.exp(logits - m)
    s = jnp.sum(p, axis=-1, keepdims=True)
    attn_ref[0] = p * pl.reciprocal(s, approx=True)

    # --- classification head (Dropout = identity at eval) ---
    # f_r' = relu(projection_region(g_p))
    fr = jnp.dot(g_mean_bf, wr_ref[...], preferred_element_type=jnp.float32) + br_ref[...]
    fr = jnp.maximum(fr, 0.0)                                        # [1, 256]
    # f_g' = relu(projection_global(f_g))
    fg = jnp.dot(f_g.astype(jnp.bfloat16), wg_ref[...],
                 preferred_element_type=jnp.float32) + bg_ref[...]
    fg = jnp.maximum(fg, 0.0)                                        # [1, 256]
    # net = relu(fc1(cat([f_r', f_g'], -1)))
    net = (jnp.dot(fr.astype(jnp.bfloat16), w1r_ref[...], preferred_element_type=jnp.float32)
           + jnp.dot(fg.astype(jnp.bfloat16), w1g_ref[...], preferred_element_type=jnp.float32)
           + b1_ref[...])
    net = jnp.maximum(net, 0.0)                                      # [1, 256]
    # out = output(net)   (lane-padded to NC_PAD; wrapper slices to num_class)
    out = jnp.dot(net.astype(jnp.bfloat16), wo_ref[...],
                  preferred_element_type=jnp.float32) + bo_ref[...]
    out_ref[0] = out.astype(out_ref.dtype)                           # [1, NC_PAD]


# ----------------------------------------------------------------------------
# Forward wrapper (PyTorch-facing: NCHW input, same return structure)
# ----------------------------------------------------------------------------

def image_encoder_classification_forward(x_nchw, params, *, num_class):
    B, Cin, H, W = x_nchw.shape
    HW = H * W
    hid = params["enc_w"].shape[1]
    nc_pad = params["wo_t_pad"].shape[1]

    # Single layout transform: NCHW -> [B, HW, Cin] channels-last, bf16 for the MXU.
    x_bhwc = jnp.transpose(x_nchw, (0, 2, 3, 1)).reshape(B, HW, Cin).astype(jnp.bfloat16)

    full2d = lambda b: (0, 0)
    out_pad, attn = pl.pallas_call(
        functools.partial(_fused_kernel, hw=HW),
        out_shape=(jax.ShapeDtypeStruct((B, 1, nc_pad), jnp.float32),
                   jax.ShapeDtypeStruct((B, 2, HW), jnp.float32)),
        grid_spec=pltpu.PrefetchScalarGridSpec(
            num_scalar_prefetch=0,
            grid=(B,),
            in_specs=[
                pl.BlockSpec((1, HW, Cin), lambda b: (b, 0, 0)),   # x
                pl.BlockSpec((Cin, hid), full2d),                  # enc_w
                pl.BlockSpec((1, hid), full2d),                    # enc_b
                pl.BlockSpec((hid, hid), full2d),                  # enc_wg
                pl.BlockSpec((2, hid), full2d),                    # attn_v (l4, l5)
                pl.BlockSpec((hid, 256), full2d),                  # wr_t
                pl.BlockSpec((1, 256), full2d),                    # br
                pl.BlockSpec((hid, 256), full2d),                  # wg_t
                pl.BlockSpec((1, 256), full2d),                    # bg
                pl.BlockSpec((256, 256), full2d),                  # w1r_t
                pl.BlockSpec((256, 256), full2d),                  # w1g_t
                pl.BlockSpec((1, 256), full2d),                    # b1
                pl.BlockSpec((256, nc_pad), full2d),               # wo_t_pad
                pl.BlockSpec((1, nc_pad), full2d),                 # bo_pad
            ],
            out_specs=[
                pl.BlockSpec((1, 1, nc_pad), lambda b: (b, 0, 0)),
                pl.BlockSpec((1, 2, HW), lambda b: (b, 0, 0)),
            ],
        ),
        compiler_params=pltpu.CompilerParams(
            dimension_semantics=("parallel",),
            vmem_limit_bytes=32 * 1024 * 1024,
        ),
    )(x_bhwc,
      params["enc_w"], params["enc_b"], params["enc_wg"], params["attn_v"],
      params["wr_t"], params["br"], params["wg_t"], params["bg"],
      params["w1r_t"], params["w1g_t"], params["b1"],
      params["wo_t_pad"], params["bo_pad"])

    out = out_pad[:, 0, :num_class]
    attn_l4 = attn[:, 0, :].reshape(B, 1, H, W)
    attn_l5 = attn[:, 1, :].reshape(B, 1, H, W)
    return out, attn_l4, params["scalar_l4"], attn_l5, params["scalar_l5"]


# ----------------------------------------------------------------------------
# Deterministic parameter init (shapes from the module __init__)
# ----------------------------------------------------------------------------

def init_params(key, in_channels=4, hidden_dim=32, num_class=14):
    ks = jax.random.split(key, 12)
    scale = 0.02
    bf = jnp.bfloat16

    # synthetic encoder params (bf16 matmul weights, f32 biases)
    enc_w = (scale * jax.random.normal(ks[0], (in_channels, hidden_dim), jnp.float32)).astype(bf)
    enc_b = jnp.zeros((1, hidden_dim), jnp.float32)
    enc_wg = (scale * jax.random.normal(ks[1], (hidden_dim, hidden_dim), jnp.float32)).astype(bf)
    attn_v = (scale * jax.random.normal(ks[2], (2, hidden_dim), jnp.float32)).astype(bf)
    scalar_l4 = jnp.float32(0.5)
    scalar_l5 = jnp.float32(0.25)

    # classification head params (PyTorch Linear weights are [out, in]; stored transposed)
    wr_t = (scale * jax.random.normal(ks[4], (hidden_dim, 256), jnp.float32)).astype(bf)
    br = jnp.zeros((1, 256), jnp.float32)
    wg_t = (scale * jax.random.normal(ks[5], (hidden_dim, 256), jnp.float32)).astype(bf)
    bg = jnp.zeros((1, 256), jnp.float32)
    # fc1: Linear(512, 256); columns [:256] multiply f_r', columns [256:] multiply f_g'.
    w1r_t = (scale * jax.random.normal(ks[6], (256, 256), jnp.float32)).astype(bf)
    w1g_t = (scale * jax.random.normal(ks[7], (256, 256), jnp.float32)).astype(bf)
    b1 = jnp.zeros((1, 256), jnp.float32)

    # output: Linear(256, num_class), lane-padded to a multiple of 128 for dense stores.
    wo_t = scale * jax.random.normal(ks[8], (256, num_class), jnp.float32)
    bo = jnp.zeros((1, num_class), jnp.float32)
    nc_pad = ((num_class + 127) // 128) * 128
    wo_t_pad = jnp.zeros((256, nc_pad), jnp.float32).at[:, :num_class].set(wo_t).astype(bf)
    bo_pad = jnp.zeros((1, nc_pad), jnp.float32).at[:, :num_class].set(bo)

    return dict(enc_w=enc_w, enc_b=enc_b, enc_wg=enc_wg, attn_v=attn_v,
                scalar_l4=scalar_l4, scalar_l5=scalar_l5,
                wr_t=wr_t, br=br, wg_t=wg_t, bg=bg,
                w1r_t=w1r_t, w1g_t=w1g_t, b1=b1,
                wo_t_pad=wo_t_pad, bo_pad=bo_pad)


if __name__ == "__main__":
    key = jax.random.PRNGKey(0)
    k_x, k_p = jax.random.split(key)

    B, Cin, H, W = 2, 4, 16, 16
    hidden_dim, num_class = 32, 14

    x = jax.random.normal(k_x, (B, Cin, H, W), jnp.float32)   # NCHW, like PyTorch
    params = init_params(k_p, in_channels=Cin, hidden_dim=hidden_dim, num_class=num_class)

    fwd = jax.jit(functools.partial(image_encoder_classification_forward, num_class=num_class))
    out, attn_l4, s_l4, attn_l5, s_l5 = fwd(x, params)
    jax.block_until_ready(out)

    assert out.shape == (B, num_class)
    assert attn_l4.shape == (B, 1, H, W) and attn_l5.shape == (B, 1, H, W)
    print("KERNEL_OK")
</pallas_src>

<mosaic_0001>
module attributes {stable_mosaic.version = 11 : i64} {
  func.func @_fused_kernel(%arg0: i32, %arg1: memref<1x256x4xbf16, #tpu.memory_space<vmem>>, %arg2: memref<4x32xbf16, #tpu.memory_space<vmem>>, %arg3: memref<1x32xf32, #tpu.memory_space<vmem>>, %arg4: memref<32x32xbf16, #tpu.memory_space<vmem>>, %arg5: memref<2x32xbf16, #tpu.memory_space<vmem>>, %arg6: memref<32x256xbf16, #tpu.memory_space<vmem>>, %arg7: memref<1x256xf32, #tpu.memory_space<vmem>>, %arg8: memref<32x256xbf16, #tpu.memory_space<vmem>>, %arg9: memref<1x256xf32, #tpu.memory_space<vmem>>, %arg10: memref<256x256xbf16, #tpu.memory_space<vmem>>, %arg11: memref<256x256xbf16, #tpu.memory_space<vmem>>, %arg12: memref<1x256xf32, #tpu.memory_space<vmem>>, %arg13: memref<256x128xbf16, #tpu.memory_space<vmem>>, %arg14: memref<1x128xf32, #tpu.memory_space<vmem>>, %arg15: memref<1x1x128xf32, #tpu.memory_space<vmem>>, %arg16: memref<1x2x256xf32, #tpu.memory_space<vmem>>) attributes {dimension_semantics = [#tpu.dimension_semantics<parallel>], iteration_bounds = array<i64: 2>, scalar_prefetch = 0 : i64, scratch_operands = 0 : i64, tpu.core_type = #tpu.core_type<tc>, window_params = [{transform_indices = @transform_0, window_bounds = array<i64: 1, 256, 4>}, {pipeline_mode = #tpu.pipeline_mode<synchronous>, transform_indices = @transform_1, window_bounds = array<i64: 4, 32>}, {pipeline_mode = #tpu.pipeline_mode<synchronous>, transform_indices = @transform_2, window_bounds = array<i64: 1, 32>}, {pipeline_mode = #tpu.pipeline_mode<synchronous>, transform_indices = @transform_3, window_bounds = array<i64: 32, 32>}, {pipeline_mode = #tpu.pipeline_mode<synchronous>, transform_indices = @transform_4, window_bounds = array<i64: 2, 32>}, {pipeline_mode = #tpu.pipeline_mode<synchronous>, transform_indices = @transform_5, window_bounds = array<i64: 32, 256>}, {pipeline_mode = #tpu.pipeline_mode<synchronous>, transform_indices = @transform_6, window_bounds = array<i64: 1, 256>}, {pipeline_mode = #tpu.pipeline_mode<synchronous>, transform_indices = @transform_7, window_bounds = array<i64: 32, 256>}, {pipeline_mode = #tpu.pipeline_mode<synchronous>, transform_indices = @transform_8, window_bounds = array<i64: 1, 256>}, {pipeline_mode = #tpu.pipeline_mode<synchronous>, transform_indices = @transform_9, window_bounds = array<i64: 256, 256>}, {pipeline_mode = #tpu.pipeline_mode<synchronous>, transform_indices = @transform_10, window_bounds = array<i64: 256, 256>}, {pipeline_mode = #tpu.pipeline_mode<synchronous>, transform_indices = @transform_11, window_bounds = array<i64: 1, 256>}, {pipeline_mode = #tpu.pipeline_mode<synchronous>, transform_indices = @transform_12, window_bounds = array<i64: 256, 128>}, {pipeline_mode = #tpu.pipeline_mode<synchronous>, transform_indices = @transform_13, window_bounds = array<i64: 1, 128>}, {transform_indices = @transform_14, window_bounds = array<i64: 1, 1, 128>}, {transform_indices = @transform_15, window_bounds = array<i64: 1, 2, 256>}]} {
    %c0 = arith.constant 0 : index
    %c0_0 = arith.constant 0 : index
    %c0_1 = arith.constant 0 : index
    %0 = vector.load %arg1[%c0, %c0_0, %c0_1] : memref<1x256x4xbf16, #tpu.memory_space<vmem>>, vector<1x256x4xbf16>
    %1 = vector.shape_cast %0 : vector<1x256x4xbf16> to vector<256x4xbf16>
    %c0_2 = arith.constant 0 : index
    %c0_3 = arith.constant 0 : index
    %2 = vector.load %arg2[%c0_2, %c0_3] : memref<4x32xbf16, #tpu.memory_space<vmem>>, vector<4x32xbf16>
    %cst = arith.constant dense<0.000000e+00> : vector<256x32xf32>
    %3 = tpu.matmul %1, %2, %cst {dimension_numbers = #tpu.dot_dimension_numbers<[1], [0], [0], [1], [0, 0, 1, 1], [], []>} : vector<256x4xbf16>, vector<4x32xbf16>, vector<256x32xf32> -> vector<256x32xf32>
    %c0_4 = arith.constant 0 : index
    %c0_5 = arith.constant 0 : index
    %4 = vector.load %arg3[%c0_4, %c0_5] : memref<1x32xf32, #tpu.memory_space<vmem>>, vector<1x32xf32>
    %5 = vector.broadcast %4 : vector<1x32xf32> to vector<256x32xf32>
    %6 = arith.addf %3, %5 : vector<256x32xf32>
    %cst_6 = arith.constant 0.000000e+00 : f32
    %7 = vector.broadcast %cst_6 : f32 to vector<256x32xf32>
    %8 = arith.maximumf %6, %7 : vector<256x32xf32>
    %9 = arith.truncf %8 : vector<256x32xf32> to vector<256x32xbf16>
    %cst_7 = arith.constant 3.906250e-03 : bf16
    %10 = vector.broadcast %cst_7 : bf16 to vector<1x256xbf16>
    %cst_8 = arith.constant dense<0.000000e+00> : vector<1x32xf32>
    %11 = tpu.matmul %10, %9, %cst_8 {dimension_numbers = #tpu.dot_dimension_numbers<[1], [0], [0], [1], [0, 0, 1, 1], [], []>} : vector<1x256xbf16>, vector<256x32xbf16>, vector<1x32xf32> -> vector<1x32xf32>
    %12 = arith.truncf %11 : vector<1x32xf32> to vector<1x32xbf16>
    %c0_9 = arith.constant 0 : index
    %c0_10 = arith.constant 0 : index
    %13 = vector.load %arg4[%c0_9, %c0_10] : memref<32x32xbf16, #tpu.memory_space<vmem>>, vector<32x32xbf16>
    %cst_11 = arith.constant dense<0.000000e+00> : vector<1x32xf32>
    %14 = tpu.matmul %12, %13, %cst_11 {dimension_numbers = #tpu.dot_dimension_numbers<[1], [0], [0], [1], [0, 0, 1, 1], [], []>} : vector<1x32xbf16>, vector<32x32xbf16>, vector<1x32xf32> -> vector<1x32xf32>
    %c0_12 = arith.constant 0 : index
    %c0_13 = arith.constant 0 : index
    %15 = vector.load %arg5[%c0_12, %c0_13] : memref<2x32xbf16, #tpu.memory_space<vmem>>, vector<2x32xbf16>
    %16 = tpu.transpose %9, [1, 0] : vector<256x32xbf16> -> vector<32x256xbf16>
    %cst_14 = arith.constant dense<0.000000e+00> : vector<2x256xf32>
    %17 = tpu.matmul %15, %16, %cst_14 {dimension_numbers = #tpu.dot_dimension_numbers<[1], [0], [0], [1], [0, 0, 1, 1], [], []>} : vector<2x32xbf16>, vector<32x256xbf16>, vector<2x256xf32> -> vector<2x256xf32>
    %cst_15 = arith.constant dense<0xFF800000> : vector<2xf32>
    %18 = vector.multi_reduction <maximumf>, %17, %cst_15 [1] : vector<2x256xf32> to vector<2xf32>
    %19 = vector.shape_cast %18 : vector<2xf32> to vector<2x1xf32>
    %20 = vector.broadcast %19 : vector<2x1xf32> to vector<2x256xf32>
    %21 = arith.subf %17, %20 : vector<2x256xf32>
    %22 = math.exp %21 : vector<2x256xf32>
    %cst_16 = arith.constant dense<0.000000e+00> : vector<2xf32>
    %23 = vector.multi_reduction <add>, %22, %cst_16 [1] : vector<2x256xf32> to vector<2xf32>
    %24 = vector.shape_cast %23 : vector<2xf32> to vector<2x1xf32>
    %25 = tpu.reciprocal %24 {approx = true} : vector<2x1xf32> -> vector<2x1xf32>
    %26 = vector.broadcast %25 : vector<2x1xf32> to vector<2x256xf32>
    %27 = arith.mulf %22, %26 : vector<2x256xf32>
    %c0_17 = arith.constant 0 : index
    %c0_18 = arith.constant 0 : index
    %c0_19 = arith.constant 0 : index
    %28 = vector.load %arg16[%c0_17, %c0_18, %c0_19] : memref<1x2x256xf32, #tpu.memory_space<vmem>>, vector<1x2x256xf32>
    %29 = vector.shape_cast %28 : vector<1x2x256xf32> to vector<2x256xf32>
    %30 = vector.shape_cast %27 : vector<2x256xf32> to vector<1x2x256xf32>
    tpu.vector_store %arg16[%c0_17, %c0_18, %c0_19], %30 {strides = array<i32>} : memref<1x2x256xf32, #tpu.memory_space<vmem>>, vector<1x2x256xf32>,
    %c0_20 = arith.constant 0 : index
    %c0_21 = arith.constant 0 : index
    %31 = vector.load %arg6[%c0_20, %c0_21] : memref<32x256xbf16, #tpu.memory_space<vmem>>, vector<32x256xbf16>
    %cst_22 = arith.constant dense<0.000000e+00> : vector<1x256xf32>
    %32 = tpu.matmul %12, %31, %cst_22 {dimension_numbers = #tpu.dot_dimension_numbers<[1], [0], [0], [1], [0, 0, 1, 1], [], []>} : vector<1x32xbf16>, vector<32x256xbf16>, vector<1x256xf32> -> vector<1x256xf32>
    %c0_23 = arith.constant 0 : index
    %c0_24 = arith.constant 0 : index
    %33 = vector.load %arg7[%c0_23, %c0_24] : memref<1x256xf32, #tpu.memory_space<vmem>>, vector<1x256xf32>
    %34 = arith.addf %32, %33 : vector<1x256xf32>
    %cst_25 = arith.constant 0.000000e+00 : f32
    %35 = vector.broadcast %cst_25 : f32 to vector<1x256xf32>
    %36 = arith.maximumf %34, %35 : vector<1x256xf32>
    %37 = arith.truncf %14 : vector<1x32xf32> to vector<1x32xbf16>
    %c0_26 = arith.constant 0 : index
    %c0_27 = arith.constant 0 : index
    %38 = vector.load %arg8[%c0_26, %c0_27] : memref<32x256xbf16, #tpu.memory_space<vmem>>, vector<32x256xbf16>
    %cst_28 = arith.constant dense<0.000000e+00> : vector<1x256xf32>
    %39 = tpu.matmul %37, %38, %cst_28 {dimension_numbers = #tpu.dot_dimension_numbers<[1], [0], [0], [1], [0, 0, 1, 1], [], []>} : vector<1x32xbf16>, vector<32x256xbf16>, vector<1x256xf32> -> vector<1x256xf32>
    %c0_29 = arith.constant 0 : index
    %c0_30 = arith.constant 0 : index
    %40 = vector.load %arg9[%c0_29, %c0_30] : memref<1x256xf32, #tpu.memory_space<vmem>>, vector<1x256xf32>
    %41 = arith.addf %39, %40 : vector<1x256xf32>
    %cst_31 = arith.constant 0.000000e+00 : f32
    %42 = vector.broadcast %cst_31 : f32 to vector<1x256xf32>
    %43 = arith.maximumf %41, %42 : vector<1x256xf32>
    %44 = arith.truncf %36 : vector<1x256xf32> to vector<1x256xbf16>
    %c0_32 = arith.constant 0 : index
    %c0_33 = arith.constant 0 : index
    %45 = vector.load %arg10[%c0_32, %c0_33] : memref<256x256xbf16, #tpu.memory_space<vmem>>, vector<256x256xbf16>
    %cst_34 = arith.constant dense<0.000000e+00> : vector<1x256xf32>
    %46 = tpu.matmul %44, %45, %cst_34 {dimension_numbers = #tpu.dot_dimension_numbers<[1], [0], [0], [1], [0, 0, 1, 1], [], []>} : vector<1x256xbf16>, vector<256x256xbf16>, vector<1x256xf32> -> vector<1x256xf32>
    %47 = arith.truncf %43 : vector<1x256xf32> to vector<1x256xbf16>
    %c0_35 = arith.constant 0 : index
    %c0_36 = arith.constant 0 : index
    %48 = vector.load %arg11[%c0_35, %c0_36] : memref<256x256xbf16, #tpu.memory_space<vmem>>, vector<256x256xbf16>
    %cst_37 = arith.constant dense<0.000000e+00> : vector<1x256xf32>
    %49 = tpu.matmul %47, %48, %cst_37 {dimension_numbers = #tpu.dot_dimension_numbers<[1], [0], [0], [1], [0, 0, 1, 1], [], []>} : vector<1x256xbf16>, vector<256x256xbf16>, vector<1x256xf32> -> vector<1x256xf32>
    %50 = arith.addf %46, %49 : vector<1x256xf32>
    %c0_38 = arith.constant 0 : index
    %c0_39 = arith.constant 0 : index
    %51 = vector.load %arg12[%c0_38, %c0_39] : memref<1x256xf32, #tpu.memory_space<vmem>>, vector<1x256xf32>
    %52 = arith.addf %50, %51 : vector<1x256xf32>
    %cst_40 = arith.constant 0.000000e+00 : f32
    %53 = vector.broadcast %cst_40 : f32 to vector<1x256xf32>
    %54 = arith.maximumf %52, %53 : vector<1x256xf32>
    %55 = arith.truncf %54 : vector<1x256xf32> to vector<1x256xbf16>
    %c0_41 = arith.constant 0 : index
    %c0_42 = arith.constant 0 : index
    %56 = vector.load %arg13[%c0_41, %c0_42] : memref<256x128xbf16, #tpu.memory_space<vmem>>, vector<256x128xbf16>
    %cst_43 = arith.constant dense<0.000000e+00> : vector<1x128xf32>
    %57 = tpu.matmul %55, %56, %cst_43 {dimension_numbers = #tpu.dot_dimension_numbers<[1], [0], [0], [1], [0, 0, 1, 1], [], []>} : vector<1x256xbf16>, vector<256x128xbf16>, vector<1x128xf32> -> vector<1x128xf32>
    %c0_44 = arith.constant 0 : index
    %c0_45 = arith.constant 0 : index
    %58 = vector.load %arg14[%c0_44, %c0_45] : memref<1x128xf32, #tpu.memory_space<vmem>>, vector<1x128xf32>
    %59 = arith.addf %57, %58 : vector<1x128xf32>
    %c0_46 = arith.constant 0 : index
    %c0_47 = arith.constant 0 : index
    %c0_48 = arith.constant 0 : index
    %60 = vector.load %arg15[%c0_46, %c0_47, %c0_48] : memref<1x1x128xf32, #tpu.memory_space<vmem>>, vector<1x1x128xf32>
    %61 = vector.shape_cast %60 : vector<1x1x128xf32> to vector<1x128xf32>
    %62 = vector.shape_cast %59 : vector<1x128xf32> to vector<1x1x128xf32>
    tpu.vector_store %arg15[%c0_46, %c0_47, %c0_48], %62 {strides = array<i32>} : memref<1x1x128xf32, #tpu.memory_space<vmem>>, vector<1x1x128xf32>,
    return
  }
  func.func @transform_0(%arg0: i32) -> (i32, i32, i32) {
    %c0_i32 = arith.constant 0 : i32
    %c0_i32_0 = arith.constant 0 : i32
    %c0_i32_1 = arith.constant 0 : i32
    return %arg0, %c0_i32, %c0_i32_0 : i32, i32, i32
  }
  func.func @transform_1(%arg0: i32) -> (i32, i32) {
    %c0_i32 = arith.constant 0 : i32
    %c0_i32_0 = arith.constant 0 : i32
    %c0_i32_1 = arith.constant 0 : i32
    return %c0_i32, %c0_i32_0 : i32, i32
  }
  func.func @transform_2(%arg0: i32) -> (i32, i32) {
    %c0_i32 = arith.constant 0 : i32
    %c0_i32_0 = arith.constant 0 : i32
    %c0_i32_1 = arith.constant 0 : i32
    return %c0_i32, %c0_i32_0 : i32, i32
  }
  func.func @transform_3(%arg0: i32) -> (i32, i32) {
    %c0_i32 = arith.constant 0 : i32
    %c0_i32_0 = arith.constant 0 : i32
    %c0_i32_1 = arith.constant 0 : i32
    return %c0_i32, %c0_i32_0 : i32, i32
  }
  func.func @transform_4(%arg0: i32) -> (i32, i32) {
    %c0_i32 = arith.constant 0 : i32
    %c0_i32_0 = arith.constant 0 : i32
    %c0_i32_1 = arith.constant 0 : i32
    return %c0_i32, %c0_i32_0 : i32, i32
  }
  func.func @transform_5(%arg0: i32) -> (i32, i32) {
    %c0_i32 = arith.constant 0 : i32
    %c0_i32_0 = arith.constant 0 : i32
    %c0_i32_1 = arith.constant 0 : i32
    return %c0_i32, %c0_i32_0 : i32, i32
  }
  func.func @transform_6(%arg0: i32) -> (i32, i32) {
    %c0_i32 = arith.constant 0 : i32
    %c0_i32_0 = arith.constant 0 : i32
    %c0_i32_1 = arith.constant 0 : i32
    return %c0_i32, %c0_i32_0 : i32, i32
  }
  func.func @transform_7(%arg0: i32) -> (i32, i32) {
    %c0_i32 = arith.constant 0 : i32
    %c0_i32_0 = arith.constant 0 : i32
    %c0_i32_1 = arith.constant 0 : i32
    return %c0_i32, %c0_i32_0 : i32, i32
  }
  func.func @transform_8(%arg0: i32) -> (i32, i32) {
    %c0_i32 = arith.constant 0 : i32
    %c0_i32_0 = arith.constant 0 : i32
    %c0_i32_1 = arith.constant 0 : i32
    return %c0_i32, %c0_i32_0 : i32, i32
  }
  func.func @transform_9(%arg0: i32) -> (i32, i32) {
    %c0_i32 = arith.constant 0 : i32
    %c0_i32_0 = arith.constant 0 : i32
    %c0_i32_1 = arith.constant 0 : i32
    return %c0_i32, %c0_i32_0 : i32, i32
  }
  func.func @transform_10(%arg0: i32) -> (i32, i32) {
    %c0_i32 = arith.constant 0 : i32
    %c0_i32_0 = arith.constant 0 : i32
    %c0_i32_1 = arith.constant 0 : i32
    return %c0_i32, %c0_i32_0 : i32, i32
  }
  func.func @transform_11(%arg0: i32) -> (i32, i32) {
    %c0_i32 = arith.constant 0 : i32
    %c0_i32_0 = arith.constant 0 : i32
    %c0_i32_1 = arith.constant 0 : i32
    return %c0_i32, %c0_i32_0 : i32, i32
  }
  func.func @transform_12(%arg0: i32) -> (i32, i32) {
    %c0_i32 = arith.constant 0 : i32
    %c0_i32_0 = arith.constant 0 : i32
    %c0_i32_1 = arith.constant 0 : i32
    return %c0_i32, %c0_i32_0 : i32, i32
  }
  func.func @transform_13(%arg0: i32) -> (i32, i32) {
    %c0_i32 = arith.constant 0 : i32
    %c0_i32_0 = arith.constant 0 : i32
    %c0_i32_1 = arith.constant 0 : i32
    return %c0_i32, %c0_i32_0 : i32, i32
  }
  func.func @transform_14(%arg0: i32) -> (i32, i32, i32) {
    %c0_i32 = arith.constant 0 : i32
    %c0_i32_0 = arith.constant 0 : i32
    %c0_i32_1 = arith.constant 0 : i32
    return %arg0, %c0_i32, %c0_i32_0 : i32, i32, i32
  }
  func.func @transform_15(%arg0: i32) -> (i32, i32, i32) {
    %c0_i32 = arith.constant 0 : i32
    %c0_i32_0 = arith.constant 0 : i32
    %c0_i32_1 = arith.constant 0 : i32
    return %arg0, %c0_i32, %c0_i32_0 : i32, i32, i32
  }
}

</mosaic_0001>

<llo_original>
// kernel: squeeze.4
$region0: #{squeeze.4}
  %s0 = inlined_call_operand.vmem [shape: f32[2,256], index: 0, kind: input, shape index: {}]
  %s1 = inlined_call_operand.hbm [shape: f32[2,1,16,16], index: 1, kind: output, shape index: {}]
  $region1: #{squeeze.4} parent=0
    #allocation0 [shape = 'u8[16384]{0}', space=vmem, size = 0x4000, scoped, tag = 'operand span for operand 1']
    #allocation1 [shape = 's32[1]{0}', space=sflag, size = 0x4, scoped, tag = 'scoped memory for squeeze.4']
    #allocation2 [shape = 'u8[8192]{0}', space=vmem, size = 0x2000, scoped, tag = 'scoped mem for input reshape']
    %2 = vsyncpa [#allocation1], 0
    %s4 = sshllo.u32 0, 2
    %s5 = scalar_lea.vmem %s0, 2
    %v6 = vld [vmem:[%s5] sm:%s4]
    %s7 = scalar_lea.vmem [#allocation2], 8
    %8 = vst [vmem:[%s7] sm:%s4] %v6
    %v9 = vld [vmem:[%s0] sm:%s4]
    %10 = vst [vmem:[#allocation2] sm:%s4] %v9
    %v11 = vld [vmem:[#allocation2] sm:$0x3]
    %vm12 = vcmask 130048
    %13 = vst.msk [vmem:[#allocation0] ss:$16 sm:$0x3] %vm12, %v11
    %s14 = scalar_lea.vmem [#allocation2], 8
    %v15 = vld [vmem:[%s14] sm:$0x3]
    %vm16 = vcmask 130048
    %s17 = scalar_lea.vmem [#allocation0], 8
    %18 = vst.msk [vmem:[%s17] ss:$16 sm:$0x3] %vm16, %v15
    %v19 = vld.sshfl [vmem:[#allocation2] sm:$0xff pattern:$0x99999180]
    %20 = vrot.lane.b32.xlu0 %v19, 112
    %v21 = vpop.permute.xlu0 %20
    %vm22 = vcmask 130048
    %s23 = scalar_lea.vmem [#allocation0], 1
    %24 = vst.msk [vmem:[%s23] ss:$8 sm:$0xf] %vm22, %v21
    %v25 = vld.sshfl [vmem:[#allocation2] sm:$0xff pattern:$0x99999180]
    %26 = vrot.lane.b32.xlu0 %v25, 96
    %v27 = vpop.permute.xlu0 %26
    %vm28 = vcmask 130048
    %s29 = scalar_lea.vmem [#allocation0], 2
    %30 = vst.msk [vmem:[%s29] ss:$8 sm:$0xf] %vm28, %v27
    %v31 = vld.sshfl [vmem:[#allocation2] sm:$0xff pattern:$0x99999180]
    %32 = vrot.lane.b32.xlu0 %v31, 80
    %v33 = vpop.permute.xlu0 %32
    %vm34 = vcmask 130048
    %s35 = scalar_lea.vmem [#allocation0], 3
    %36 = vst.msk [vmem:[%s35] ss:$8 sm:$0xf] %vm34, %v33
    %v37 = vld.sshfl [vmem:[#allocation2] sm:$0xff pattern:$0x99999180]
    %38 = vrot.lane.b32.xlu0 %v37, 64
    %v39 = vpop.permute.xlu0 %38
    %vm40 = vcmask 130048
    %s41 = scalar_lea.vmem [#allocation0], 4
    %42 = vst.msk [vmem:[%s41] ss:$8 sm:$0xf] %vm40, %v39
    %v43 = vld.sshfl [vmem:[#allocation2] sm:$0xff pattern:$0x99999180]
    %44 = vrot.lane.b32.xlu0 %v43, 48
    %v45 = vpop.permute.xlu0 %44
    %vm46 = vcmask 130048
    %s47 = scalar_lea.vmem [#allocation0], 5
    %48 = vst.msk [vmem:[%s47] ss:$8 sm:$0xf] %vm46, %v45
    %v49 = vld.sshfl [vmem:[#allocation2] sm:$0xff pattern:$0x99999180]
    %50 = vrot.lane.b32.xlu0 %v49, 32
    %v51 = vpop.permute.xlu0 %50
    %vm52 = vcmask 130048
    %s53 = scalar_lea.vmem [#allocation0], 6
    %54 = vst.msk [vmem:[%s53] ss:$8 sm:$0xf] %vm52, %v51
    %v55 = vld.sshfl [vmem:[#allocation2] sm:$0xff pattern:$0x99999180]
    %56 = vrot.lane.b32.xlu0 %v55, 16
    %v57 = vpop.permute.xlu0 %56
    %vm58 = vcmask 130048
    %s59 = scalar_lea.vmem [#allocation0], 7
    %60 = vst.msk [vmem:[%s59] ss:$8 sm:$0xf] %vm58, %v57
    %s62 = ssub.s32 512, 512
    %63 = vsyncadd [#allocation1], %s62
    %s65 = sshll.u32 [#allocation0], 4
    %s66 = int_to_ptr.vmem [resolvable:$true] %s65
    %68 = dma.vmem_to_hbm [thread:$0]  %s66, 512, %s1, [#allocation1]
    %69 = dma.done [#allocation1], 512
    %70 = vsyncpa [#allocation1], 1

// kernel: image_encoder_classification_forward.1
$region0: #{image_encoder_classification_forward.1}
  #allocation0 [shape = 'u32[]', space=smem, size = 0x4, offset = 0x4, fixed_abs, tag = 'smem constant byte address 0x4 - core index']
  #allocation1 [shape = 'u32[144,128]{1,0:T(1,128)}', space=vmem, size = 0x12000, scoped, tag = 'internal scratch']
  %s0 = inlined_call_operand.vmem [shape: bf16[2,256,4], index: 0, kind: input, shape index: {}]
  %s1 = inlined_call_operand.vmem [shape: bf16[4,32], index: 1, kind: input, shape index: {}]
  %s2 = inlined_call_operand.vmem [shape: f32[1,32], index: 2, kind: input, shape index: {}]
  %s3 = inlined_call_operand.vmem [shape: bf16[32,32], index: 3, kind: input, shape index: {}]
  %s4 = inlined_call_operand.vmem [shape: bf16[2,32], index: 4, kind: input, shape index: {}]
  %s5 = inlined_call_operand.hbm [shape: bf16[32,256], index: 5, kind: input, shape index: {}]
  %s6 = inlined_call_operand.vmem [shape: f32[1,256], index: 6, kind: input, shape index: {}]
  %s7 = inlined_call_operand.hbm [shape: bf16[32,256], index: 7, kind: input, shape index: {}]
  %s8 = inlined_call_operand.vmem [shape: f32[1,256], index: 8, kind: input, shape index: {}]
  %s9 = inlined_call_operand.vmem [shape: bf16[256,256], index: 9, kind: input, shape index: {}]
  %s10 = inlined_call_operand.vmem [shape: bf16[256,256], index: 10, kind: input, shape index: {}]
  %s11 = inlined_call_operand.vmem [shape: f32[1,256], index: 11, kind: input, shape index: {}]
  %s12 = inlined_call_operand.hbm [shape: bf16[256,128], index: 12, kind: input, shape index: {}]
  %s13 = inlined_call_operand.vmem [shape: f32[1,128], index: 13, kind: input, shape index: {}]
  %s14 = inlined_call_operand.hbm [shape: f32[2,1,128], index: 14, kind: output, shape index: {0}]
  %s15 = inlined_call_operand.vmem [shape: f32[2,2,256], index: 15, kind: output, shape index: {1}]
  %16 = xla_tuple %s14, %s15
  %s17 = sld [smem:[#allocation0]]
  $region109: #{image_encoder_classification_forward.1} parent=0
    _
  %s19 = ssub.s32 1, %s17
  %s20 = scalar_select 0, %s19, %s17
  $region1: #{image_encoder_classification_forward.1} parent=0
    #allocation2 [shape = 'u8[16384]{0}', space=vmem, size = 0x4000, scoped, tag = 'input window, operand 5, single buffered']
    #allocation3 [shape = 's32[2]{0}', space=sflag, size = 0x8, scoped, tag = 'scoped memory for image_encoder_classification_forward.1']
    #allocation4 [shape = 's32[2]{0}', space=sflag, size = 0x8, scoped, tag = 'scoped memory for image_encoder_classification_forward.1']
    #allocation5 [shape = 'u8[16384]{0}', space=vmem, size = 0x4000, scoped, tag = 'input window, operand 7, single buffered']
    #allocation6 [shape = 's32[1]{0}', space=sflag, size = 0x4, scoped, tag = 'scoped memory for image_encoder_classification_forward.1']
    #allocation7 [shape = 'u8[65536]{0}', space=vmem, size = 0x10000, scoped, tag = 'input window, operand 12, single buffered']
    #allocation8 [shape = 'u8[1024]{0}', space=vmem, size = 0x400, scoped, tag = 'output window, operand 0']
    %21 = vsyncpa [#allocation3], 0
    %22 = vsyncpa [#allocation6], 0
    %23 = vsyncpa [#allocation4], 0
    %s24 = scalar_lea.sflag [#allocation4], 1
    %25 = vsyncpa %s24, 0
    loop: start=0, step=1, limit=4
    $region2: #{image_encoder_classification_forward.1} parent=1 // loop_pre_header
      _
    $region3: #{image_encoder_classification_forward.1} parent=1 // loop_header
      %s27 = sphi 0, %s31
      %p28 = scmp.ge.s32.totalorder %s27, 4
      %s37 = sphi 0, %s39
      %s40 = sphi 0, %s37
      %s41 = sphi 0, %s40
      %s57 = sphi 0, %s41
      %s61 = sphi 0, %s61
      %s63 = sphi 0, %s61
      %s64 = sphi 0, %s63
      %s78 = sphi 0, %s64
      %s82 = sphi 0, %s82
      %s84 = sphi 0, %s82
      %s85 = sphi 0, %s84
      %s99 = sphi 0, %s85
      %s103 = sphi 0, %s103
      %s105 = sphi 0, %s103
      %s106 = sphi 0, %s105
      %s120 = sphi 0, %s106
      %s124 = sphi 0, %s124
      %s126 = sphi 0, %s124
      %s127 = sphi 0, %s126
      %s141 = sphi 0, %s127
      %s145 = sphi 0, %s145
      %s147 = sphi 0, %s145
      %s148 = sphi 0, %s147
      %s162 = sphi 0, %s148
      %s166 = sphi 0, %s166
      %s168 = sphi 0, %s166
      %s169 = sphi 0, %s168
      %s183 = sphi 0, %s169
      %s187 = sphi 0, %s187
      %s189 = sphi 0, %s187
      %s190 = sphi 0, %s189
      %s204 = sphi 0, %s190
      %s208 = sphi 0, %s208
      %s210 = sphi 0, %s208
      %s211 = sphi 0, %s210
      %s225 = sphi 0, %s211
      %s229 = sphi 0, %s229
      %s231 = sphi 0, %s229
      %s232 = sphi 0, %s231
      %s246 = sphi 0, %s232
      %s250 = sphi 0, %s250
      %s252 = sphi 0, %s250
      %s253 = sphi 0, %s252
      %s267 = sphi 0, %s253
      %s271 = sphi 0, %s271
      %s273 = sphi 0, %s271
      %s274 = sphi 0, %s273
      %s288 = sphi 0, %s274
      %s292 = sphi 0, %s292
      %s294 = sphi 0, %s292
      %s295 = sphi 0, %s294
      %s309 = sphi 0, %s295
      %s313 = sphi 0, %s313
      %s315 = sphi 0, %s313
      %s316 = sphi 0, %s315
      %s330 = sphi 0, %s316
      %s336 = sphi 0, %s338
      %s339 = sphi 0, %s336
      %s340 = sphi 0, %s339
      %s356 = sphi 0, %s340
      %s362 = sphi 0, %s364
      %s365 = sphi 0, %s362
      %s366 = sphi 0, %s365
      %s382 = sphi 0, %s366
    $region4: #{image_encoder_classification_forward.1} parent=1 // loop_header_branch
      %30 = sbr.rel (%p28) target = $region8
    $region5: #{image_encoder_classification_forward.1} parent=1 // loop_body
      %s32 = ssub.s32 %s27, 1
      %s33 = ssub.s32 %s27, 2
      %s34 = sadd.s32 %s27, 1
      %s35 = ssub.s32 %s27, %s34
      %p36 = scmp.eq.s32.totalorder %s35, 0
      %s38 = sadd.s32 %s37, 1
      %s39 = scalar_select %p36, %s37, %s38
      %p42 = pneg %p36
      %p43 = scmp.eq.s32.totalorder %s27, 1
      %p44 = por %p42, %p43
      %p45 = scmp.ne.s32.totalorder %s37, %s40
      %p46 = scmp.eq.s32.totalorder %s27, 0
      %p47 = por %p45, %p46
      %p48 = scmp.ne.s32.totalorder %s37, %s40
      %p49 = scmp.eq.s32.totalorder %s32, 1
      %p50 = por %p48, %p49
      %p51 = scmp.ne.s32.totalorder %s40, %s41
      %p52 = scmp.eq.s32.totalorder %s32, 0
      %p53 = por %p51, %p52
      %p54 = scmp.ne.s32.totalorder %s40, %s41
      %p55 = scmp.eq.s32.totalorder %s33, 1
      %p56 = por %p54, %p55
      %p58 = scmp.ne.s32.totalorder %s41, %s57
      %p59 = scmp.eq.s32.totalorder %s33, 0
      %p60 = por %p58, %p59
      %s62 = sadd.s32 %s61, 1
      %p65 = scmp.eq.s32.totalorder %s27, 1
      %p66 = scmp.ne.s32.totalorder %s61, %s63
      %p67 = scmp.eq.s32.totalorder %s27, 0
      %p68 = por %p66, %p67
      %p69 = scmp.ne.s32.totalorder %s61, %s63
      %p70 = scmp.eq.s32.totalorder %s32, 1
      %p71 = por %p69, %p70
      %p72 = scmp.ne.s32.totalorder %s63, %s64
      %p73 = scmp.eq.s32.totalorder %s32, 0
      %p74 = por %p72, %p73
      %p75 = scmp.ne.s32.totalorder %s63, %s64
      %p76 = scmp.eq.s32.totalorder %s33, 1
      %p77 = por %p75, %p76
      %p79 = scmp.ne.s32.totalorder %s64, %s78
      %p80 = scmp.eq.s32.totalorder %s33, 0
      %p81 = por %p79, %p80
      %s83 = sadd.s32 %s82, 1
      %p86 = scmp.eq.s32.totalorder %s27, 1
      %p87 = scmp.ne.s32.totalorder %s82, %s84
      %p88 = scmp.eq.s32.totalorder %s27, 0
      %p89 = por %p87, %p88
      %p90 = scmp.ne.s32.totalorder %s82, %s84
      %p91 = scmp.eq.s32.totalorder %s32, 1
      %p92 = por %p90, %p91
      %p93 = scmp.ne.s32.totalorder %s84, %s85
      %p94 = scmp.eq.s32.totalorder %s32, 0
      %p95 = por %p93, %p94
      %p96 = scmp.ne.s32.totalorder %s84, %s85
      %p97 = scmp.eq.s32.totalorder %s33, 1
      %p98 = por %p96, %p97
      %p100 = scmp.ne.s32.totalorder %s85, %s99
      %p101 = scmp.eq.s32.totalorder %s33, 0
      %p102 = por %p100, %p101
      %s104 = sadd.s32 %s103, 1
      %p107 = scmp.eq.s32.totalorder %s27, 1
      %p108 = scmp.ne.s32.totalorder %s103, %s105
      %p109 = scmp.eq.s32.totalorder %s27, 0
      %p110 = por %p108, %p109
      %p111 = scmp.ne.s32.totalorder %s103, %s105
      %p112 = scmp.eq.s32.totalorder %s32, 1
      %p113 = por %p111, %p112
      %p114 = scmp.ne.s32.totalorder %s105, %s106
      %p115 = scmp.eq.s32.totalorder %s32, 0
      %p116 = por %p114, %p115
      %p117 = scmp.ne.s32.totalorder %s105, %s106
      %p118 = scmp.eq.s32.totalorder %s33, 1
      %p119 = por %p117, %p118
      %p121 = scmp.ne.s32.totalorder %s106, %s120
      %p122 = scmp.eq.s32.totalorder %s33, 0
      %p123 = por %p121, %p122
      %s125 = sadd.s32 %s124, 1
      %p128 = scmp.eq.s32.totalorder %s27, 1
      %p129 = scmp.ne.s32.totalorder %s124, %s126
      %p130 = scmp.eq.s32.totalorder %s27, 0
      %p131 = por %p129, %p130
      %p132 = scmp.ne.s32.totalorder %s124, %s126
      %p133 = scmp.eq.s32.totalorder %s32, 1
      %p134 = por %p132, %p133
      %p135 = scmp.ne.s32.totalorder %s126, %s127
      %p136 = scmp.eq.s32.totalorder %s32, 0
      %p137 = por %p135, %p136
      %p138 = scmp.ne.s32.totalorder %s126, %s127
      %p139 = scmp.eq.s32.totalorder %s33, 1
      %p140 = por %p138, %p139
      %p142 = scmp.ne.s32.totalorder %s127, %s141
      %p143 = scmp.eq.s32.totalorder %s33, 0
      %p144 = por %p142, %p143
      %s146 = sadd.s32 %s145, 1
      %p149 = scmp.eq.s32.totalorder %s27, 1
      %p150 = scmp.ne.s32.totalorder %s145, %s147
      %p151 = scmp.eq.s32.totalorder %s27, 0
      %p152 = por %p150, %p151
      %p153 = scmp.ne.s32.totalorder %s145, %s147
      %p154 = scmp.eq.s32.totalorder %s32, 1
      %p155 = por %p153, %p154
      %p156 = scmp.ne.s32.totalorder %s147, %s148
      %p157 = scmp.eq.s32.totalorder %s32, 0
      %p158 = por %p156, %p157
      %p159 = scmp.ne.s32.totalorder %s147, %s148
      %p160 = scmp.eq.s32.totalorder %s33, 1
      %p161 = por %p159, %p160
      %p163 = scmp.ne.s32.totalorder %s148, %s162
      %p164 = scmp.eq.s32.totalorder %s33, 0
      %p165 = por %p163, %p164
      %s167 = sadd.s32 %s166, 1
      %p170 = scmp.eq.s32.totalorder %s27, 1
      %p171 = scmp.ne.s32.totalorder %s166, %s168
      %p172 = scmp.eq.s32.totalorder %s27, 0
      %p173 = por %p171, %p172
      %p174 = scmp.ne.s32.totalorder %s166, %s168
      %p175 = scmp.eq.s32.totalorder %s32, 1
      %p176 = por %p174, %p175
      %p177 = scmp.ne.s32.totalorder %s168, %s169
      %p178 = scmp.eq.s32.totalorder %s32, 0
      %p179 = por %p177, %p178
      %p180 = scmp.ne.s32.totalorder %s168, %s169
      %p181 = scmp.eq.s32.totalorder %s33, 1
      %p182 = por %p180, %p181
      %p184 = scmp.ne.s32.totalorder %s169, %s183
      %p185 = scmp.eq.s32.totalorder %s33, 0
      %p186 = por %p184, %p185
      %s188 = sadd.s32 %s187, 1
      %p191 = scmp.eq.s32.totalorder %s27, 1
      %p192 = scmp.ne.s32.totalorder %s187, %s189
      %p193 = scmp.eq.s32.totalorder %s27, 0
      %p194 = por %p192, %p193
      %p195 = scmp.ne.s32.totalorder %s187, %s189
      %p196 = scmp.eq.s32.totalorder %s32, 1
      %p197 = por %p195, %p196
      %p198 = scmp.ne.s32.totalorder %s189, %s190
      %p199 = scmp.eq.s32.totalorder %s32, 0
      %p200 = por %p198, %p199
      %p201 = scmp.ne.s32.totalorder %s189, %s190
      %p202 = scmp.eq.s32.totalorder %s33, 1
      %p203 = por %p201, %p202
      %p205 = scmp.ne.s32.totalorder %s190, %s204
      %p206 = scmp.eq.s32.totalorder %s33, 0
      %p207 = por %p205, %p206
      %s209 = sadd.s32 %s208, 1
      %p212 = scmp.eq.s32.totalorder %s27, 1
      %p213 = scmp.ne.s32.totalorder %s208, %s210
      %p214 = scmp.eq.s32.totalorder %s27, 0
      %p215 = por %p213, %p214
      %p216 = scmp.ne.s32.totalorder %s208, %s210
      %p217 = scmp.eq.s32.totalorder %s32, 1
      %p218 = por %p216, %p217
      %p219 = scmp.ne.s32.totalorder %s210, %s211
      %p220 = scmp.eq.s32.totalorder %s32, 0
      %p221 = por %p219, %p220
      %p222 = scmp.ne.s32.totalorder %s210, %s211
      %p223 = scmp.eq.s32.totalorder %s33, 1
      %p224 = por %p222, %p223
      %p226 = scmp.ne.s32.totalorder %s211, %s225
      %p227 = scmp.eq.s32.totalorder %s33, 0
      %p228 = por %p226, %p227
      %s230 = sadd.s32 %s229, 1
      %p233 = scmp.eq.s32.totalorder %s27, 1
      %p234 = scmp.ne.s32.totalorder %s229, %s231
      %p235 = scmp.eq.s32.totalorder %s27, 0
      %p236 = por %p234, %p235
      %p237 = scmp.ne.s32.totalorder %s229, %s231
      %p238 = scmp.eq.s32.totalorder %s32, 1
      %p239 = por %p237, %p238
      %p240 = scmp.ne.s32.totalorder %s231, %s232
      %p241 = scmp.eq.s32.totalorder %s32, 0
      %p242 = por %p240, %p241
      %p243 = scmp.ne.s32.totalorder %s231, %s232
      %p244 = scmp.eq.s32.totalorder %s33, 1
      %p245 = por %p243, %p244
      %p247 = scmp.ne.s32.totalorder %s232, %s246
      %p248 = scmp.eq.s32.totalorder %s33, 0
      %p249 = por %p247, %p248
      %s251 = sadd.s32 %s250, 1
      %p254 = scmp.eq.s32.totalorder %s27, 1
      %p255 = scmp.ne.s32.totalorder %s250, %s252
      %p256 = scmp.eq.s32.totalorder %s27, 0
      %p257 = por %p255, %p256
      %p258 = scmp.ne.s32.totalorder %s250, %s252
      %p259 = scmp.eq.s32.totalorder %s32, 1
      %p260 = por %p258, %p259
      %p261 = scmp.ne.s32.totalorder %s252, %s253
      %p262 = scmp.eq.s32.totalorder %s32, 0
      %p263 = por %p261, %p262
      %p264 = scmp.ne.s32.totalorder %s252, %s253
      %p265 = scmp.eq.s32.totalorder %s33, 1
      %p266 = por %p264, %p265
      %p268 = scmp.ne.s32.totalorder %s253, %s267
      %p269 = scmp.eq.s32.totalorder %s33, 0
      %p270 = por %p268, %p269
      %s272 = sadd.s32 %s271, 1
      %p275 = scmp.eq.s32.totalorder %s27, 1
      %p276 = scmp.ne.s32.totalorder %s271, %s273
      %p277 = scmp.eq.s32.totalorder %s27, 0
      %p278 = por %p276, %p277
      %p279 = scmp.ne.s32.totalorder %s271, %s273
      %p280 = scmp.eq.s32.totalorder %s32, 1
      %p281 = por %p279, %p280
      %p282 = scmp.ne.s32.totalorder %s273, %s274
      %p283 = scmp.eq.s32.totalorder %s32, 0
      %p284 = por %p282, %p283
      %p285 = scmp.ne.s32.totalorder %s273, %s274
      %p286 = scmp.eq.s32.totalorder %s33, 1
      %p287 = por %p285, %p286
      %p289 = scmp.ne.s32.totalorder %s274, %s288
      %p290 = scmp.eq.s32.totalorder %s33, 0
      %p291 = por %p289, %p290
      %s293 = sadd.s32 %s292, 1
      %p296 = scmp.eq.s32.totalorder %s27, 1
      %p297 = scmp.ne.s32.totalorder %s292, %s294
      %p298 = scmp.eq.s32.totalorder %s27, 0
      %p299 = por %p297, %p298
      %p300 = scmp.ne.s32.totalorder %s292, %s294
      %p301 = scmp.eq.s32.totalorder %s32, 1
      %p302 = por %p300, %p301
      %p303 = scmp.ne.s32.totalorder %s294, %s295
      %p304 = scmp.eq.s32.totalorder %s32, 0
      %p305 = por %p303, %p304
      %p306 = scmp.ne.s32.totalorder %s294, %s295
      %p307 = scmp.eq.s32.totalorder %s33, 1
      %p308 = por %p306, %p307
      %p310 = scmp.ne.s32.totalorder %s295, %s309
      %p311 = scmp.eq.s32.totalorder %s33, 0
      %p312 = por %p310, %p311
      %s314 = sadd.s32 %s313, 1
      %p317 = scmp.eq.s32.totalorder %s27, 1
      %p318 = scmp.ne.s32.totalorder %s313, %s315
      %p319 = scmp.eq.s32.totalorder %s27, 0
      %p320 = por %p318, %p319
      %p321 = scmp.ne.s32.totalorder %s313, %s315
      %p322 = scmp.eq.s32.totalorder %s32, 1
      %p323 = por %p321, %p322
      %p324 = scmp.ne.s32.totalorder %s315, %s316
      %p325 = scmp.eq.s32.totalorder %s32, 0
      %p326 = por %p324, %p325
      %p327 = scmp.ne.s32.totalorder %s315, %s316
      %p328 = scmp.eq.s32.totalorder %s33, 1
      %p329 = por %p327, %p328
      %p331 = scmp.ne.s32.totalorder %s316, %s330
      %p332 = scmp.eq.s32.totalorder %s33, 0
      %p333 = por %p331, %p332
      %s334 = ssub.s32 %s27, %s34
      %p335 = scmp.eq.s32.totalorder %s334, 0
      %s337 = sadd.s32 %s336, 1
      %s338 = scalar_select %p335, %s336, %s337
      %p341 = pneg %p335
      %p342 = scmp.eq.s32.totalorder %s27, 1
      %p343 = por %p341, %p342
      %p344 = scmp.ne.s32.totalorder %s336, %s339
      %p345 = scmp.eq.s32.totalorder %s27, 0
      %p346 = por %p344, %p345
      %p347 = scmp.ne.s32.totalorder %s336, %s339
      %p348 = scmp.eq.s32.totalorder %s32, 1
      %p349 = por %p347, %p348
      %p350 = scmp.ne.s32.totalorder %s339, %s340
      %p351 = scmp.eq.s32.totalorder %s32, 0
      %p352 = por %p350, %p351
      %p353 = scmp.ne.s32.totalorder %s339, %s340
      %p354 = scmp.eq.s32.totalorder %s33, 1
      %p355 = por %p353, %p354
      %p357 = scmp.ne.s32.totalorder %s340, %s356
      %p358 = scmp.eq.s32.totalorder %s33, 0
      %p359 = por %p357, %p358
      %s360 = ssub.s32 %s27, %s34
      %p361 = scmp.eq.s32.totalorder %s360, 0
      %s363 = sadd.s32 %s362, 1
      %s364 = scalar_select %p361, %s362, %s363
      %p367 = pneg %p361
      %p368 = scmp.eq.s32.totalorder %s27, 1
      %p369 = por %p367, %p368
      %p370 = scmp.ne.s32.totalorder %s362, %s365
      %p371 = scmp.eq.s32.totalorder %s27, 0
      %p372 = por %p370, %p371
      %p373 = scmp.ne.s32.totalorder %s362, %s365
      %p374 = scmp.eq.s32.totalorder %s32, 1
      %p375 = por %p373, %p374
      %p376 = scmp.ne.s32.totalorder %s365, %s366
      %p377 = scmp.eq.s32.totalorder %s32, 0
      %p378 = por %p376, %p377
      %p379 = scmp.ne.s32.totalorder %s365, %s366
      %p380 = scmp.eq.s32.totalorder %s33, 1
      %p381 = por %p379, %p380
      %p383 = scmp.ne.s32.totalorder %s366, %s382
      %p384 = scmp.eq.s32.totalorder %s33, 0
      %p385 = por %p383, %p384
      %p386 = scmp.le.s32.totalorder 1, %s27
      %p387 = scmp.lt.s32.totalorder %s27, 3
      %p388 = pnand %p386, %p387
      %p389 = pneg %p388
      // Predicated region
      $region9: #{image_encoder_classification_forward.1} parent=5 // pred_check
        _
      $region10: #{image_encoder_classification_forward.1} parent=5 // pred_check_branch
        %391 = sbr.rel (%p388) target = $region12
      $region11: #{image_encoder_classification_forward.1} parent=5 // pred_region
        %s392 = ssub.s32 %s27, 1
        // Predicated region
        $region13: #{image_encoder_classification_forward.1} parent=11 // pred_check
          %p393 = pneg %p74
        $region14: #{image_encoder_classification_forward.1} parent=11 // pred_check_branch
          %395 = sbr.rel (%p393) target = $region16
        $region15: #{image_encoder_classification_forward.1} parent=11 // pred_region
          _
        $region16: #{image_encoder_classification_forward.1} parent=11 // pred_fallthru
          _
        // Predicated region
        $region17: #{image_encoder_classification_forward.1} parent=11 // pred_check
          %p396 = pneg %p95
        $region18: #{image_encoder_classification_forward.1} parent=11 // pred_check_branch
          %398 = sbr.rel (%p396) target = $region20
        $region19: #{image_encoder_classification_forward.1} parent=11 // pred_region
          _
        $region20: #{image_encoder_classification_forward.1} parent=11 // pred_fallthru
          _
        // Predicated region
        $region21: #{image_encoder_classification_forward.1} parent=11 // pred_check
          %p399 = pneg %p116
        $region22: #{image_encoder_classification_forward.1} parent=11 // pred_check_branch
          %401 = sbr.rel (%p399) target = $region24
        $region23: #{image_encoder_classification_forward.1} parent=11 // pred_region
          _
        $region24: #{image_encoder_classification_forward.1} parent=11 // pred_fallthru
          _
        // Predicated region
        $region25: #{image_encoder_classification_forward.1} parent=11 // pred_check
          %p402 = pneg %p137
        $region26: #{image_encoder_classification_forward.1} parent=11 // pred_check_branch
          %404 = sbr.rel (%p402) target = $region28
        $region27: #{image_encoder_classification_forward.1} parent=11 // pred_region
          _
        $region28: #{image_encoder_classification_forward.1} parent=11 // pred_fallthru
          _
        // Predicated region
        $region29: #{image_encoder_classification_forward.1} parent=11 // pred_check
          %p405 = pneg %p158
        $region30: #{image_encoder_classification_forward.1} parent=11 // pred_check_branch
          %407 = sbr.rel (%p405) target = $region32
        $region31: #{image_encoder_classification_forward.1} parent=11 // pred_region
          %s409 = ssub.s32 512, 512
          %410 = vsyncadd [#allocation3], %s409
          %s411 = sshll.u32 [#allocation2], 4
          %s412 = int_to_ptr.vmem [resolvable:$true] %s411
          %417 = dma.hbm_to_vmem [thread:$0]  %s5, 512, %s412, [#allocation3], 128, 128, 8
        $region32: #{image_encoder_classification_forward.1} parent=11 // pred_fallthru
          _
        // Predicated region
        $region33: #{image_encoder_classification_forward.1} parent=11 // pred_check
          %p418 = pneg %p179
        $region34: #{image_encoder_classification_forward.1} parent=11 // pred_check_branch
          %420 = sbr.rel (%p418) target = $region36
        $region35: #{image_encoder_classification_forward.1} parent=11 // pred_region
          _
        $region36: #{image_encoder_classification_forward.1} parent=11 // pred_fallthru
          _
        // Predicated region
        $region37: #{image_encoder_classification_forward.1} parent=11 // pred_check
          %p421 = pneg %p200
        $region38: #{image_encoder_classification_forward.1} parent=11 // pred_check_branch
          %423 = sbr.rel (%p421) target = $region40
        $region39: #{image_encoder_classification_forward.1} parent=11 // pred_region
          %s425 = ssub.s32 512, 512
          %426 = vsyncadd [#allocation6], %s425
          %s427 = sshll.u32 [#allocation5], 4
          %s428 = int_to_ptr.vmem [resolvable:$true] %s427
          %433 = dma.hbm_to_vmem [thread:$0]  %s7, 512, %s428, [#allocation6], 128, 128, 8
        $region40: #{image_encoder_classification_forward.1} parent=11 // pred_fallthru
          _
        // Predicated region
        $region41: #{image_encoder_classification_forward.1} parent=11 // pred_check
          %p434 = pneg %p221
        $region42: #{image_encoder_classification_forward.1} parent=11 // pred_check_branch
          %436 = sbr.rel (%p434) target = $region44
        $region43: #{image_encoder_classification_forward.1} parent=11 // pred_region
          _
        $region44: #{image_encoder_classification_forward.1} parent=11 // pred_fallthru
          _
        // Predicated region
        $region45: #{image_encoder_classification_forward.1} parent=11 // pred_check
          %p437 = pneg %p242
        $region46: #{image_encoder_classification_forward.1} parent=11 // pred_check_branch
          %439 = sbr.rel (%p437) target = $region48
        $region47: #{image_encoder_classification_forward.1} parent=11 // pred_region
          _
        $region48: #{image_encoder_classification_forward.1} parent=11 // pred_fallthru
          _
        // Predicated region
        $region49: #{image_encoder_classification_forward.1} parent=11 // pred_check
          %p440 = pneg %p263
        $region50: #{image_encoder_classification_forward.1} parent=11 // pred_check_branch
          %442 = sbr.rel (%p440) target = $region52
        $region51: #{image_encoder_classification_forward.1} parent=11 // pred_region
          _
        $region52: #{image_encoder_classification_forward.1} parent=11 // pred_fallthru
          _
        // Predicated region
        $region53: #{image_encoder_classification_forward.1} parent=11 // pred_check
          %p443 = pneg %p284
        $region54: #{image_encoder_classification_forward.1} parent=11 // pred_check_branch
          %445 = sbr.rel (%p443) target = $region56
        $region55: #{image_encoder_classification_forward.1} parent=11 // pred_region
          _
        $region56: #{image_encoder_classification_forward.1} parent=11 // pred_fallthru
          _
        // Predicated region
        $region57: #{image_encoder_classification_forward.1} parent=11 // pred_check
          %p446 = pneg %p305
        $region58: #{image_encoder_classification_forward.1} parent=11 // pred_check_branch
          %448 = sbr.rel (%p446) target = $region60
        $region59: #{image_encoder_classification_forward.1} parent=11 // pred_region
          %s450 = ssub.s32 2048, 2048
          %451 = vsyncadd [#allocation6], %s450
          %s452 = sshll.u32 [#allocation7], 4
          %s453 = int_to_ptr.vmem [resolvable:$true] %s452
          %458 = dma.hbm_to_vmem [thread:$0]  %s12, 2048, %s453, [#allocation6], 64, 64, 4
        $region60: #{image_encoder_classification_forward.1} parent=11 // pred_fallthru
          _
        // Predicated region
        $region61: #{image_encoder_classification_forward.1} parent=11 // pred_check
          %p459 = pneg %p326
        $region62: #{image_encoder_classification_forward.1} parent=11 // pred_check_branch
          %461 = sbr.rel (%p459) target = $region64
        $region63: #{image_encoder_classification_forward.1} parent=11 // pred_region
          _
        $region64: #{image_encoder_classification_forward.1} parent=11 // pred_fallthru
          _
      $region12: #{image_encoder_classification_forward.1} parent=5 // pred_fallthru
        _
      %p462 = scmp.lt.s32.totalorder %s27, 2
      // Predicated region
      $region65: #{image_encoder_classification_forward.1} parent=5 // pred_check
        %p463 = pneg %p462
      $region66: #{image_encoder_classification_forward.1} parent=5 // pred_check_branch
        %465 = sbr.rel (%p463) target = $region68
      $region67: #{image_encoder_classification_forward.1} parent=5 // pred_region
        // Predicated region
        $region69: #{image_encoder_classification_forward.1} parent=67 // pred_check
          %p466 = pneg %p47
        $region70: #{image_encoder_classification_forward.1} parent=67 // pred_check_branch
          %468 = sbr.rel (%p466) target = $region72
        $region71: #{image_encoder_classification_forward.1} parent=67 // pred_region
          %p469 = scmp.lt.s32.totalorder %s27, 1
          %s470 = scalar_select %p469, %s27, 1
          %s471 = smul.addr %s470, 32
          %s472 = smul.addr %s471, 4
          %s473 = scalar_lea.vmem %s0, %s472
        $region72: #{image_encoder_classification_forward.1} parent=67 // pred_fallthru
          _
      $region68: #{image_encoder_classification_forward.1} parent=5 // pred_fallthru
        _
      %p474 = scmp.le.s32.totalorder 1, %s27
      %p475 = scmp.lt.s32.totalorder %s27, 3
      %p476 = pnand %p474, %p475
      %p477 = pneg %p476
      // Predicated region
      $region73: #{image_encoder_classification_forward.1} parent=5 // pred_check
        _
      $region74: #{image_encoder_classification_forward.1} parent=5 // pred_check_branch
        %479 = sbr.rel (%p476) target = $region76
      $region75: #{image_encoder_classification_forward.1} parent=5 // pred_region
        %s480 = ssub.s32 %s27, 1
        // Predicated region
        $region77: #{image_encoder_classification_forward.1} parent=75 // pred_check
          %p481 = pneg %p158
        $region78: #{image_encoder_classification_forward.1} parent=75 // pred_check_branch
          %483 = sbr.rel (%p481) target = $region80
        $region79: #{image_encoder_classification_forward.1} parent=75 // pred_region
          %484 = dma.done [#allocation3], 512
        $region80: #{image_encoder_classification_forward.1} parent=75 // pred_fallthru
          _
        // Predicated region
        $region81: #{image_encoder_classification_forward.1} parent=75 // pred_check
          %p485 = pneg %p200
        $region82: #{image_encoder_classification_forward.1} parent=75 // pred_check_branch
          %487 = sbr.rel (%p485) target = $region84
        $region83: #{image_encoder_classification_forward.1} parent=75 // pred_region
          %488 = dma.done [#allocation6], 512
        $region84: #{image_encoder_classification_forward.1} parent=75 // pred_fallthru
          _
        // Predicated region
        $region85: #{image_encoder_classification_forward.1} parent=75 // pred_check
          %p489 = pneg %p305
        $region86: #{image_encoder_classification_forward.1} parent=75 // pred_check_branch
          %491 = sbr.rel (%p489) target = $region88
        $region87: #{image_encoder_classification_forward.1} parent=75 // pred_region
          %492 = dma.done [#allocation6], 2048
        $region88: #{image_encoder_classification_forward.1} parent=75 // pred_fallthru
          _
        %p493 = scmp.lt.s32.totalorder %s32, 1
        %s494 = scalar_select %p493, %s32, 1
        %s495 = smul.addr %s494, 32
        %s496 = smul.addr %s495, 4
        %s497 = scalar_lea.vmem %s0, %s496
        %p498 = pneg %p53
        %p499 = pneg %p50
        %p500 = pneg %p74
        %p501 = pneg %p71
        %p502 = pneg %p95
        %p503 = pneg %p92
        %p504 = pneg %p116
        %p505 = pneg %p113
        %p506 = pneg %p137
        %p507 = pneg %p134
        %p508 = pneg %p158
        %p509 = pneg %p155
        %p510 = pneg %p179
        %p511 = pneg %p176
        %p512 = pneg %p200
        %p513 = pneg %p197
        %p514 = pneg %p221
        %p515 = pneg %p218
        %p516 = pneg %p242
        %p517 = pneg %p239
        %p518 = pneg %p263
        %p519 = pneg %p260
        %p520 = pneg %p284
        %p521 = pneg %p281
        %p522 = pneg %p305
        %p523 = pneg %p302
        %p524 = pneg %p326
        %p525 = pneg %p323
        %p526 = pneg %p352
        %p527 = pneg %p349
        %s528 = sand.u32 %s339, 1
        %s529 = scalar_lea.sflag [#allocation4], %s528
        %s530 = sand.u32 %s339, 1
        %s531 = scalar_lea.vmem [#allocation8], %s530
        %p532 = pneg %p378
        %p533 = pneg %p375
        %p534 = scmp.lt.s32.totalorder %s32, 1
        %s535 = scalar_select %p534, %s32, 1
        %s536 = smul.addr %s535, 2
        %s537 = smul.addr %s536, 2
        %s538 = scalar_lea.vmem %s15, %s537
        %p539 = scmp.lt.s32.totalorder %s32, 1
        %s540 = scalar_select %p539, %s32, 1
        %s541 = smul.addr %s540, 32
        %s542 = smul.addr %s541, 4
        %s543 = scalar_lea.vmem %s0, %s542
        %p544 = scmp.lt.s32.totalorder %s32, 1
        %s545 = scalar_select %p544, %s32, 1
        %s546 = smul.addr %s545, 2
        %s547 = smul.addr %s546, 2
        %s548 = scalar_lea.vmem %s15, %s547
        %v551 = vld [vmem:[%s543] sm:$0xf]
        %v552 = vld [vmem:[%s543 + $0x4] sm:$0xf]
        %v553 = vld [vmem:[%s543 + $0x8] sm:$0xf]
        %v554 = vld [vmem:[%s543 + $0xc] sm:$0xf]
        %v555 = vld [vmem:[%s543 + $0x10] sm:$0xf]
        %v556 = vld [vmem:[%s543 + $0x14] sm:$0xf]
        %v557 = vld [vmem:[%s543 + $0x18] sm:$0xf]
        %v558 = vld [vmem:[%s543 + $0x1c] sm:$0xf]
        %v559 = vld [vmem:[%s543 + $0x20] sm:$0xf]
        %v560 = vld [vmem:[%s543 + $0x24] sm:$0xf]
        %v561 = vld [vmem:[%s543 + $0x28] sm:$0xf]
        %v562 = vld [vmem:[%s543 + $0x2c] sm:$0xf]
        %v563 = vld [vmem:[%s543 + $0x30] sm:$0xf]
        %v564 = vld [vmem:[%s543 + $0x34] sm:$0xf]
        %v565 = vld [vmem:[%s543 + $0x38] sm:$0xf]
        %v566 = vld [vmem:[%s543 + $0x3c] sm:$0xf]
        %v567 = vld [vmem:[%s543 + $0x40] sm:$0xf]
        %v568 = vld [vmem:[%s543 + $0x44] sm:$0xf]
        %v569 = vld [vmem:[%s543 + $0x48] sm:$0xf]
        %v570 = vld [vmem:[%s543 + $0x4c] sm:$0xf]
        %v571 = vld [vmem:[%s543 + $0x50] sm:$0xf]
        %v572 = vld [vmem:[%s543 + $0x54] sm:$0xf]
        %v573 = vld [vmem:[%s543 + $0x58] sm:$0xf]
        %v574 = vld [vmem:[%s543 + $0x5c] sm:$0xf]
        %v575 = vld [vmem:[%s543 + $0x60] sm:$0xf]
        %v576 = vld [vmem:[%s543 + $0x64] sm:$0xf]
        %v577 = vld [vmem:[%s543 + $0x68] sm:$0xf]
        %v578 = vld [vmem:[%s543 + $0x6c] sm:$0xf]
        %v579 = vld [vmem:[%s543 + $0x70] sm:$0xf]
        %v580 = vld [vmem:[%s543 + $0x74] sm:$0xf]
        %v581 = vld [vmem:[%s543 + $0x78] sm:$0xf]
        %v582 = vld [vmem:[%s543 + $0x7c] sm:$0xf]
        %v583 = vld [vmem:[%s1] sm:$0x3]
        %v584 = vld [vmem:[%s2] sm:$0x1]
        %v586 = vlaneseq
        %v587 = vshrl.u32 %v586, 7
        %v588 = vsub.s32 0, %v587
        %v589 = vrot.slane %v584, %v588
        %v623 = vunpack.c.l.b16 %v551
        %v624 = vunpack.c.l.b16 %v552
        %v625 = vunpack.c.l.b16 %v553
        %v626 = vunpack.c.l.b16 %v554
        %v627 = vunpack.c.l.b16 %v555
        %v628 = vunpack.c.l.b16 %v556
        %v629 = vunpack.c.l.b16 %v557
        %v630 = vunpack.c.l.b16 %v558
        %v631 = vunpack.c.l.b16 %v559
        %v632 = vunpack.c.l.b16 %v560
        %v633 = vunpack.c.l.b16 %v561
        %v634 = vunpack.c.l.b16 %v562
        %v635 = vunpack.c.l.b16 %v563
        %v636 = vunpack.c.l.b16 %v564
        %v637 = vunpack.c.l.b16 %v565
        %v638 = vunpack.c.l.b16 %v566
        %v639 = vunpack.c.l.b16 %v567
        %v640 = vunpack.c.l.b16 %v568
        %v641 = vunpack.c.l.b16 %v569
        %v642 = vunpack.c.l.b16 %v570
        %v643 = vunpack.c.l.b16 %v571
        %v644 = vunpack.c.l.b16 %v572
        %v645 = vunpack.c.l.b16 %v573
        %v646 = vunpack.c.l.b16 %v574
        %v647 = vunpack.c.l.b16 %v575
        %v648 = vunpack.c.l.b16 %v576
        %v649 = vunpack.c.l.b16 %v577
        %v650 = vunpack.c.l.b16 %v578
        %v651 = vunpack.c.l.b16 %v579
        %v652 = vunpack.c.l.b16 %v580
        %v653 = vunpack.c.l.b16 %v581
        %v654 = vunpack.c.l.b16 %v582
        %v655 = vpack.c.b16 %v624, %v623
        %v656 = vpack.c.b16 %v626, %v625
        %v657 = vpack.c.b16 %v628, %v627
        %v658 = vpack.c.b16 %v630, %v629
        %v659 = vpack.c.b16 %v632, %v631
        %v660 = vpack.c.b16 %v634, %v633
        %v661 = vpack.c.b16 %v636, %v635
        %v662 = vpack.c.b16 %v638, %v637
        %v663 = vpack.c.b16 %v640, %v639
        %v664 = vpack.c.b16 %v642, %v641
        %v665 = vpack.c.b16 %v644, %v643
        %v666 = vpack.c.b16 %v646, %v645
        %v667 = vpack.c.b16 %v648, %v647
        %v668 = vpack.c.b16 %v650, %v649
        %v669 = vpack.c.b16 %v652, %v651
        %v670 = vpack.c.b16 %v654, %v653
        %vm671 = vcmask 31744
        %v673 = vsel %vm671, %v655, 0
        %v676 = vsel %vm671, %v656, 0
        %v679 = vsel %vm671, %v657, 0
        %v682 = vsel %vm671, %v658, 0
        %v685 = vsel %vm671, %v659, 0
        %v688 = vsel %vm671, %v660, 0
        %v691 = vsel %vm671, %v661, 0
        %v694 = vsel %vm671, %v662, 0
        %v697 = vsel %vm671, %v663, 0
        %v700 = vsel %vm671, %v664, 0
        %v703 = vsel %vm671, %v665, 0
        %v706 = vsel %vm671, %v666, 0
        %v709 = vsel %vm671, %v667, 0
        %v712 = vsel %vm671, %v668, 0
        %v715 = vsel %vm671, %v669, 0
        %v718 = vsel %vm671, %v670, 0
        %vm720 = vcmask 1041408
        %v722 = vsel %vm720, %v583, 0
        %724 = vmatprep.subr.bf16.mxu0 0
        %725 = vmatpush1.bf16.msra.mxu0 %v722
        %726 = vmatprep.subr.bf16.mxu0 0
        %727 = vmatpush1.bf16.msra.mxu0 0
        %728 = vmatprep.subr.bf16.mxu0 0
        %729 = vmatpush1.bf16.msra.mxu0 0
        %730 = vmatprep.subr.bf16.mxu0 0
        %731 = vmatpush1.bf16.msra.mxu0 0
        %732 = vmatprep.subr.bf16.mxu0 0
        %733 = vmatpush1.bf16.msra.mxu0 0
        %734 = vmatprep.subr.bf16.mxu0 0
        %735 = vmatpush1.bf16.msra.mxu0 0
        %736 = vmatprep.subr.bf16.mxu0 0
        %737 = vmatpush1.bf16.msra.mxu0 0
        %738 = vmatprep.subr.bf16.mxu0 0
        %739 = vmatpush1.bf16.msra.mxu0 0
        %740 = vmatprep.subr.bf16.mxu0 0
        %741 = vmatpush1.bf16.msra.mxu0 0
        %742 = vmatprep.subr.bf16.mxu0 0
        %743 = vmatpush1.bf16.msra.mxu0 0
        %744 = vmatprep.subr.bf16.mxu0 0
        %745 = vmatpush1.bf16.msra.mxu0 0
        %746 = vmatprep.subr.bf16.mxu0 0
        %747 = vmatpush1.bf16.msra.mxu0 0
        %748 = vmatprep.subr.bf16.mxu0 0
        %749 = vmatpush1.bf16.msra.mxu0 0
        %750 = vmatprep.subr.bf16.mxu0 0
        %751 = vmatpush1.bf16.msra.mxu0 0
        %752 = vmatprep.subr.bf16.mxu0 0
        %753 = vmatpush1.bf16.msra.mxu0 0
        %754 = vmatprep.subr.bf16.mxu0 0
        %755 = vmatpush1.bf16.msra.mxu0 0
        %756 = vmatprep.mubr.bf16.mxu0 0
        %757 = vmatmul.mubr.bf16.gmra.mrb[0].mxu0 %v673
        %v758 = vpop.f32.mrb[0].mxu0
        %v759 = vadd.f32 %v589, %v758
        %v760 = vpop.f32.mrb[0].mxu0
        %v761 = vpop.f32.mrb[0].mxu0
        %v762 = vadd.f32 %v589, %v761
        %v763 = vpop.f32.mrb[0].mxu0
        %764 = vmatprep.mubr.bf16.mxu0 0
        %765 = vmatmul.mubr.bf16.gmra.mrb[0].mxu0 %v676
        %v766 = vpop.f32.mrb[0].mxu0
        %v767 = vadd.f32 %v589, %v766
        %v768 = vpop.f32.mrb[0].mxu0
        %v769 = vpop.f32.mrb[0].mxu0
        %v770 = vadd.f32 %v589, %v769
        %v771 = vpop.f32.mrb[0].mxu0
        %772 = vmatprep.mubr.bf16.mxu0 0
        %773 = vmatmul.mubr.bf16.gmra.mrb[0].mxu0 %v679
        %v774 = vpop.f32.mrb[0].mxu0
        %v775 = vadd.f32 %v589, %v774
        %v776 = vpop.f32.mrb[0].mxu0
        %v777 = vpop.f32.mrb[0].mxu0
        %v778 = vadd.f32 %v589, %v777
        %v779 = vpop.f32.mrb[0].mxu0
        %780 = vmatprep.mubr.bf16.mxu0 0
        %781 = vmatmul.mubr.bf16.gmra.mrb[0].mxu0 %v682
        %v782 = vpop.f32.mrb[0].mxu0
        %v783 = vadd.f32 %v589, %v782
        %v784 = vpop.f32.mrb[0].mxu0
        %v785 = vpop.f32.mrb[0].mxu0
        %v786 = vadd.f32 %v589, %v785
        %v787 = vpop.f32.mrb[0].mxu0
        %788 = vmatprep.mubr.bf16.mxu0 0
        %789 = vmatmul.mubr.bf16.gmra.mrb[0].mxu0 %v685
        %v790 = vpop.f32.mrb[0].mxu0
        %v791 = vadd.f32 %v589, %v790
        %v792 = vpop.f32.mrb[0].mxu0
        %v793 = vpop.f32.mrb[0].mxu0
        %v794 = vadd.f32 %v589, %v793
        %v795 = vpop.f32.mrb[0].mxu0
        %796 = vmatprep.mubr.bf16.mxu0 0
        %797 = vmatmul.mubr.bf16.gmra.mrb[0].mxu0 %v688
        %v798 = vpop.f32.mrb[0].mxu0
        %v799 = vadd.f32 %v589, %v798
        %v800 = vpop.f32.mrb[0].mxu0
        %v801 = vpop.f32.mrb[0].mxu0
        %v802 = vadd.f32 %v589, %v801
        %v803 = vpop.f32.mrb[0].mxu0
        %804 = vmatprep.mubr.bf16.mxu0 0
        %805 = vmatmul.mubr.bf16.gmra.mrb[0].mxu0 %v691
        %v806 = vpop.f32.mrb[0].mxu0
        %v807 = vadd.f32 %v589, %v806
        %v808 = vpop.f32.mrb[0].mxu0
        %v809 = vpop.f32.mrb[0].mxu0
        %v810 = vadd.f32 %v589, %v809
        %v811 = vpop.f32.mrb[0].mxu0
        %812 = vmatprep.mubr.bf16.mxu0 0
        %813 = vmatmul.mubr.bf16.gmra.mrb[0].mxu0 %v694
        %v814 = vpop.f32.mrb[0].mxu0
        %v815 = vadd.f32 %v589, %v814
        %v816 = vpop.f32.mrb[0].mxu0
        %v817 = vpop.f32.mrb[0].mxu0
        %v818 = vadd.f32 %v589, %v817
        %v819 = vpop.f32.mrb[0].mxu0
        %820 = vmatprep.mubr.bf16.mxu0 0
        %821 = vmatmul.mubr.bf16.gmra.mrb[0].mxu0 %v697
        %v822 = vpop.f32.mrb[0].mxu0
        %v823 = vadd.f32 %v589, %v822
        %v824 = vpop.f32.mrb[0].mxu0
        %v825 = vpop.f32.mrb[0].mxu0
        %v826 = vadd.f32 %v589, %v825
        %v827 = vpop.f32.mrb[0].mxu0
        %828 = vmatprep.mubr.bf16.mxu0 0
        %829 = vmatmul.mubr.bf16.gmra.mrb[0].mxu0 %v700
        %v830 = vpop.f32.mrb[0].mxu0
        %v831 = vadd.f32 %v589, %v830
        %v832 = vpop.f32.mrb[0].mxu0
        %v833 = vpop.f32.mrb[0].mxu0
        %v834 = vadd.f32 %v589, %v833
        %v835 = vpop.f32.mrb[0].mxu0
        %836 = vmatprep.mubr.bf16.mxu0 0
        %837 = vmatmul.mubr.bf16.gmra.mrb[0].mxu0 %v703
        %v838 = vpop.f32.mrb[0].mxu0
        %v839 = vadd.f32 %v589, %v838
        %v840 = vpop.f32.mrb[0].mxu0
        %v841 = vpop.f32.mrb[0].mxu0
        %v842 = vadd.f32 %v589, %v841
        %v843 = vpop.f32.mrb[0].mxu0
        %844 = vmatprep.mubr.bf16.mxu0 0
        %845 = vmatmul.mubr.bf16.gmra.mrb[0].mxu0 %v706
        %v846 = vpop.f32.mrb[0].mxu0
        %v847 = vadd.f32 %v589, %v846
        %v848 = vpop.f32.mrb[0].mxu0
        %v849 = vpop.f32.mrb[0].mxu0
        %v850 = vadd.f32 %v589, %v849
        %v851 = vpop.f32.mrb[0].mxu0
        %852 = vmatprep.mubr.bf16.mxu0 0
        %853 = vmatmul.mubr.bf16.gmra.mrb[0].mxu0 %v709
        %v854 = vpop.f32.mrb[0].mxu0
        %v855 = vadd.f32 %v589, %v854
        %v856 = vpop.f32.mrb[0].mxu0
        %v857 = vpop.f32.mrb[0].mxu0
        %v858 = vadd.f32 %v589, %v857
        %v859 = vpop.f32.mrb[0].mxu0
        %860 = vmatprep.mubr.bf16.mxu0 0
        %861 = vmatmul.mubr.bf16.gmra.mrb[0].mxu0 %v712
        %v862 = vpop.f32.mrb[0].mxu0
        %v863 = vadd.f32 %v589, %v862
        %v864 = vpop.f32.mrb[0].mxu0
        %v865 = vpop.f32.mrb[0].mxu0
        %v866 = vadd.f32 %v589, %v865
        %v867 = vpop.f32.mrb[0].mxu0
        %868 = vmatprep.mubr.bf16.mxu0 0
        %869 = vmatmul.mubr.bf16.gmra.mrb[0].mxu0 %v715
        %v870 = vpop.f32.mrb[0].mxu0
        %v871 = vadd.f32 %v589, %v870
        %v872 = vpop.f32.mrb[0].mxu0
        %v873 = vpop.f32.mrb[0].mxu0
        %v874 = vadd.f32 %v589, %v873
        %v875 = vpop.f32.mrb[0].mxu0
        %876 = vmatprep.mubr.bf16.mxu0 0
        %877 = vmatmul.mubr.bf16.gmra.mrb[0].mxu0 %v718
        %v878 = vpop.f32.mrb[0].mxu0
        %v879 = vadd.f32 %v589, %v878
        %v880 = vpop.f32.mrb[0].mxu0
        %v881 = vpop.f32.mrb[0].mxu0
        %v882 = vadd.f32 %v589, %v881
        %v883 = vpop.f32.mrb[0].mxu0
        %884 = vdwg.mxu0
        %v885 = vmax.f32 %v759, 0.0
        %v886 = vmax.f32 %v762, 0.0
        %v887 = vmax.f32 %v767, 0.0
        %v888 = vmax.f32 %v770, 0.0
        %v889 = vmax.f32 %v775, 0.0
        %v890 = vmax.f32 %v778, 0.0
        %v891 = vmax.f32 %v783, 0.0
        %v892 = vmax.f32 %v786, 0.0
        %v893 = vmax.f32 %v791, 0.0
        %v894 = vmax.f32 %v794, 0.0
        %v895 = vmax.f32 %v799, 0.0
        %v896 = vmax.f32 %v802, 0.0
        %v897 = vmax.f32 %v807, 0.0
        %v898 = vmax.f32 %v810, 0.0
        %v899 = vmax.f32 %v815, 0.0
        %v900 = vmax.f32 %v818, 0.0
        %v901 = vmax.f32 %v823, 0.0
        %v902 = vmax.f32 %v826, 0.0
        %v903 = vmax.f32 %v831, 0.0
        %v904 = vmax.f32 %v834, 0.0
        %v905 = vmax.f32 %v839, 0.0
        %v906 = vmax.f32 %v842, 0.0
        %v907 = vmax.f32 %v847, 0.0
        %v908 = vmax.f32 %v850, 0.0
        %v909 = vmax.f32 %v855, 0.0
        %v910 = vmax.f32 %v858, 0.0
        %v911 = vmax.f32 %v863, 0.0
        %v912 = vmax.f32 %v866, 0.0
        %v913 = vmax.f32 %v871, 0.0
        %v914 = vmax.f32 %v874, 0.0
        %v915 = vmax.f32 %v879, 0.0
        %v916 = vmax.f32 %v882, 0.0
        %v917 = vpack.c.bf16 %v886, %v885
        %v918 = vpack.c.bf16 %v888, %v887
        %v919 = vpack.c.bf16 %v890, %v889
        %v920 = vpack.c.bf16 %v892, %v891
        %v921 = vpack.c.bf16 %v894, %v893
        %v922 = vpack.c.bf16 %v896, %v895
        %v923 = vpack.c.bf16 %v898, %v897
        %v924 = vpack.c.bf16 %v900, %v899
        %v925 = vpack.c.bf16 %v902, %v901
        %v926 = vpack.c.bf16 %v904, %v903
        %v927 = vpack.c.bf16 %v906, %v905
        %v928 = vpack.c.bf16 %v908, %v907
        %v929 = vpack.c.bf16 %v910, %v909
        %v930 = vpack.c.bf16 %v912, %v911
        %v931 = vpack.c.bf16 %v914, %v913
        %v932 = vpack.c.bf16 %v916, %v915
        %933 = vmatprep.subr.bf16.mxu0 0
        %934 = vmatpush1.bf16.msra.mxu0 %v917
        %935 = vmatprep.subr.bf16.mxu0 0
        %936 = vmatpush1.bf16.msra.mxu0 %v918
        %937 = vmatprep.subr.bf16.mxu0 0
        %938 = vmatpush1.bf16.msra.mxu0 %v919
        %939 = vmatprep.subr.bf16.mxu0 0
        %940 = vmatpush1.bf16.msra.mxu0 %v920
        %941 = vmatprep.subr.bf16.mxu0 0
        %942 = vmatpush1.bf16.msra.mxu0 %v921
        %943 = vmatprep.subr.bf16.mxu0 0
        %944 = vmatpush1.bf16.msra.mxu0 %v922
        %945 = vmatprep.subr.bf16.mxu0 0
        %946 = vmatpush1.bf16.msra.mxu0 %v923
        %947 = vmatprep.subr.bf16.mxu0 0
        %948 = vmatpush1.bf16.msra.mxu0 %v924
        %949 = vmatprep.subr.bf16.mxu0 0
        %950 = vmatpush1.bf16.msra.mxu0 %v925
        %951 = vmatprep.subr.bf16.mxu0 0
        %952 = vmatpush1.bf16.msra.mxu0 %v926
        %953 = vmatprep.subr.bf16.mxu0 0
        %954 = vmatpush1.bf16.msra.mxu0 %v927
        %955 = vmatprep.subr.bf16.mxu0 0
        %956 = vmatpush1.bf16.msra.mxu0 %v928
        %957 = vmatprep.subr.bf16.mxu0 0
        %958 = vmatpush1.bf16.msra.mxu0 %v929
        %959 = vmatprep.subr.bf16.mxu0 0
        %960 = vmatpush1.bf16.msra.mxu0 %v930
        %961 = vmatprep.subr.bf16.mxu0 0
        %962 = vmatpush1.bf16.msra.mxu0 %v931
        %963 = vmatprep.subr.bf16.mxu0 0
        %964 = vmatpush1.bf16.msra.mxu0 %v932
        %965 = vmatprep.mubr.bf16.mxu0 998259584
        %966 = vmatmul.mubr.bf16.gmra.mrb[0].mxu0 998259584
        %v967 = vpop.f32.mrb[0].mxu0
        %v968 = vadd.f32 0.0, %v967
        %v969 = vpop.f32.mrb[0].mxu0
        %v970 = vpop.f32.mrb[0].mxu0
        %v971 = vpop.f32.mrb[0].mxu0
        %972 = vdwg.mxu0
        %v973 = vpack.c.bf16 %v968, %v968
        %v974 = vld [vmem:[%s3] sm:$0xf]
        %v975 = vld [vmem:[%s3 + $0x4] sm:$0xf]
        %v976 = vld [vmem:[%s3 + $0x8] sm:$0xf]
        %v977 = vld [vmem:[%s3 + $0xc] sm:$0xf]
        %v982 = vunpack.c.l.b16 %v974
        %v983 = vunpack.c.l.b16 %v975
        %v984 = vunpack.c.l.b16 %v976
        %v985 = vunpack.c.l.b16 %v977
        %v986 = vpack.c.b16 %v983, %v982
        %v987 = vpack.c.b16 %v985, %v984
        %vm990 = vcmask 261120
        %v992 = vsel %vm990, %v973, 0
        %994 = vmatprep.subr.bf16.mxu0 0
        %995 = vmatpush1.bf16.msra.mxu0 %v986
        %996 = vmatprep.subr.bf16.mxu0 0
        %997 = vmatpush1.bf16.msra.mxu0 %v987
        %998 = vmatprep.subr.bf16.mxu0 0
        %999 = vmatpush1.bf16.msra.mxu0 0
        %1000 = vmatprep.subr.bf16.mxu0 0
        %1001 = vmatpush1.bf16.msra.mxu0 0
        %1002 = vmatprep.subr.bf16.mxu0 0
        %1003 = vmatpush1.bf16.msra.mxu0 0
        %1004 = vmatprep.subr.bf16.mxu0 0
        %1005 = vmatpush1.bf16.msra.mxu0 0
        %1006 = vmatprep.subr.bf16.mxu0 0
        %1007 = vmatpush1.bf16.msra.mxu0 0
        %1008 = vmatprep.subr.bf16.mxu0 0
        %1009 = vmatpush1.bf16.msra.mxu0 0
        %1010 = vmatprep.subr.bf16.mxu0 0
        %1011 = vmatpush1.bf16.msra.mxu0 0
        %1012 = vmatprep.subr.bf16.mxu0 0
        %1013 = vmatpush1.bf16.msra.mxu0 0
        %1014 = vmatprep.subr.bf16.mxu0 0
        %1015 = vmatpush1.bf16.msra.mxu0 0
        %1016 = vmatprep.subr.bf16.mxu0 0
        %1017 = vmatpush1.bf16.msra.mxu0 0
        %1018 = vmatprep.subr.bf16.mxu0 0
        %1019 = vmatpush1.bf16.msra.mxu0 0
        %1020 = vmatprep.subr.bf16.mxu0 0
        %1021 = vmatpush1.bf16.msra.mxu0 0
        %1022 = vmatprep.subr.bf16.mxu0 0
        %1023 = vmatpush1.bf16.msra.mxu0 0
        %1024 = vmatprep.subr.bf16.mxu0 0
        %1025 = vmatpush1.bf16.msra.mxu0 0
        %1026 = vmatprep.mubr.bf16.mxu0 0
        %1027 = vmatmul.mubr.bf16.gmra.mrb[0].mxu0 %v992
        %v1028 = vpop.f32.mrb[0].mxu0
        %v1029 = vadd.f32 0.0, %v1028
        %v1030 = vpop.f32.mrb[0].mxu0
        %v1031 = vpop.f32.mrb[0].mxu0
        %v1032 = vpop.f32.mrb[0].mxu0
        %1033 = vdwg.mxu0
        %v1034 = vld [vmem:[%s4] sm:$0x1]
        %v1036 = vsel %vm990, %v1034, 0
        %v1039 = vsel %vm990, %v917, 0
        %v1042 = vsel %vm990, %v918, 0
        %v1045 = vsel %vm990, %v919, 0
        %v1048 = vsel %vm990, %v920, 0
        %v1051 = vsel %vm990, %v921, 0
        %v1054 = vsel %vm990, %v922, 0
        %v1057 = vsel %vm990, %v923, 0
        %v1060 = vsel %vm990, %v924, 0
        %v1063 = vsel %vm990, %v925, 0
        %v1066 = vsel %vm990, %v926, 0
        %v1069 = vsel %vm990, %v927, 0
        %v1072 = vsel %vm990, %v928, 0
        %v1075 = vsel %vm990, %v929, 0
        %v1078 = vsel %vm990, %v930, 0
        %v1081 = vsel %vm990, %v931, 0
        %v1084 = vsel %vm990, %v932, 0
        %1086 = vmatprep.subr.bf16.mxu0 0
        %1087 = vmatpush1.bf16.xpose.msra.mxu0 %v1039
        %1088 = vmatprep.subr.bf16.mxu0 0
        %1089 = vmatpush1.bf16.xpose.msra.mxu0 %v1042
        %1090 = vmatprep.subr.bf16.mxu0 0
        %1091 = vmatpush1.bf16.xpose.msra.mxu0 %v1045
        %1092 = vmatprep.subr.bf16.mxu0 0
        %1093 = vmatpush1.bf16.xpose.msra.mxu0 %v1048
        %1094 = vmatprep.subr.bf16.mxu0 0
        %1095 = vmatpush1.bf16.xpose.msra.mxu0 %v1051
        %1096 = vmatprep.subr.bf16.mxu0 0
        %1097 = vmatpush1.bf16.xpose.msra.mxu0 %v1054
        %1098 = vmatprep.subr.bf16.mxu0 0
        %1099 = vmatpush1.bf16.xpose.msra.mxu0 %v1057
        %1100 = vmatprep.subr.bf16.mxu0 0
        %1101 = vmatpush1.bf16.xpose.msra.mxu0 %v1060
        %1102 = vmatprep.subr.bf16.mxu0 0
        %1103 = vmatpush1.bf16.xpose.msra.mxu0 %v1063
        %1104 = vmatprep.subr.bf16.mxu0 0
        %1105 = vmatpush1.bf16.xpose.msra.mxu0 %v1066
        %1106 = vmatprep.subr.bf16.mxu0 0
        %1107 = vmatpush1.bf16.xpose.msra.mxu0 %v1069
        %1108 = vmatprep.subr.bf16.mxu0 0
        %1109 = vmatpush1.bf16.xpose.msra.mxu0 %v1072
        %1110 = vmatprep.subr.bf16.mxu0 0
        %1111 = vmatpush1.bf16.xpose.msra.mxu0 %v1075
        %1112 = vmatprep.subr.bf16.mxu0 0
        %1113 = vmatpush1.bf16.xpose.msra.mxu0 %v1078
        %1114 = vmatprep.subr.bf16.mxu0 0
        %1115 = vmatpush1.bf16.xpose.msra.mxu0 %v1081
        %1116 = vmatprep.subr.bf16.mxu0 0
        %1117 = vmatpush1.bf16.xpose.msra.mxu0 %v1084
        %1118 = vmatprep.mubr.bf16.mxu0 0
        %1119 = vmatmul.mubr.bf16.gmra.mrb[0].mxu0 %v1036
        %v1120 = vpop.f32.mrb[0].mxu0
        %v1121 = vadd.f32 0.0, %v1120
        %v1122 = vpop.f32.mrb[0].mxu0
        %v1123 = vadd.f32 0.0, %v1122
        %v1124 = vpop.f32.mrb[0].mxu0
        %v1125 = vpop.f32.mrb[0].mxu0
        %1126 = vdwg.mxu0
        %v1127 = vsel %vm720, %v1121, -inf
        %v1128 = vsel %vm720, %v1123, -inf
        %v1129 = vmax.f32 %v1127, %v1128
        %1130 = vmax.xlane.f32.xlu0 %v1129
        %v1131 = vpop.xlane.xlu0 %1130
        %v1132 = vsub.f32 %v1121, %v1131
        %v1133 = vsub.f32 %v1123, %v1131
        %v1134 = vmul.f32 %v1132, 1.442695
        %v1135 = vpow.pop %v1134
        %v1136 = vmul.f32 %v1133, 1.442695
        %v1137 = vpow.pop %v1136
        %v1138 = vsel %vm720, %v1135, 0.0
        %v1139 = vsel %vm720, %v1137, 0.0
        %v1140 = vadd.f32 %v1138, %v1139
        %1141 = vadd.xlane.f32.xlu0 %v1140
        %v1142 = vpop.xlane.xlu0 %1141
        %v1143 = vrcp.pop %v1142
        %v1144 = vmul.f32 %v1135, %v1143
        %v1145 = vmul.f32 %v1137, %v1143
        %v1148 = vcombine.low %v1144, %v1145
        %v1150 = vunpack.c.l.s4 1983009808
        %v1151 = vunpack.c.0.s8 %v1150
        %v1152 = vlaneseq
        %v1153 = vshrl.u32 %v1152, 7
        %v1154 = vsub.s32 %v1151, %v1153
        %v1155 = vrot.slane %v1148, %v1154
        %1157 = vst [vmem:[%s548] sm:$0xf] %v1155
        %v1158 = vld [vmem:[#allocation2] sm:$0xff]
        %v1159 = vld [vmem:[#allocation2 + $0x8] sm:$0xff]
        %v1160 = vld [vmem:[#allocation2 + $0x10] sm:$0xff]
        %v1161 = vld [vmem:[#allocation2 + $0x18] sm:$0xff]
        %v1162 = vld [vmem:[%s6] sm:$0x3]
        %v1167 = vunpack.c.l.b16 %v1158
        %v1168 = vunpack.c.h.b16 %v1158
        %v1169 = vunpack.c.l.b16 %v1159
        %v1170 = vunpack.c.h.b16 %v1159
        %v1171 = vunpack.c.l.b16 %v1160
        %v1172 = vunpack.c.h.b16 %v1160
        %v1173 = vunpack.c.l.b16 %v1161
        %v1174 = vunpack.c.h.b16 %v1161
        %v1175 = vpack.c.b16 %v1169, %v1167
        %v1176 = vpack.c.b16 %v1170, %v1168
        %v1177 = vpack.c.b16 %v1173, %v1171
        %v1178 = vpack.c.b16 %v1174, %v1172
        %v1184 = vlaneseq
        %v1185 = vshrl.u32 %v1184, 7
        %v1186 = vsub.s32 0, %v1185
        %v1187 = vrot.slane %v1162, %v1186
        %v1188 = vlaneseq
        %v1189 = vshrl.u32 %v1188, 7
        %v1190 = vsub.s32 1, %v1189
        %v1191 = vrot.slane %v1162, %v1190
        %1194 = vmatprep.subr.bf16.mxu0 %v1176
        %1195 = vmatpush1.bf16.msra.mxu0 %v1175
        %1196 = vmatprep.subr.bf16.mxu0 %v1178
        %1197 = vmatpush1.bf16.msra.mxu0 %v1177
        %1198 = vmatprep.subr.bf16.mxu0 0
        %1199 = vmatpush1.bf16.msra.mxu0 0
        %1200 = vmatprep.subr.bf16.mxu0 0
        %1201 = vmatpush1.bf16.msra.mxu0 0
        %1202 = vmatprep.subr.bf16.mxu0 0
        %1203 = vmatpush1.bf16.msra.mxu0 0
        %1204 = vmatprep.subr.bf16.mxu0 0
        %1205 = vmatpush1.bf16.msra.mxu0 0
        %1206 = vmatprep.subr.bf16.mxu0 0
        %1207 = vmatpush1.bf16.msra.mxu0 0
        %1208 = vmatprep.subr.bf16.mxu0 0
        %1209 = vmatpush1.bf16.msra.mxu0 0
        %1210 = vmatprep.subr.bf16.mxu0 0
        %1211 = vmatpush1.bf16.msra.mxu0 0
        %1212 = vmatprep.subr.bf16.mxu0 0
        %1213 = vmatpush1.bf16.msra.mxu0 0
        %1214 = vmatprep.subr.bf16.mxu0 0
        %1215 = vmatpush1.bf16.msra.mxu0 0
        %1216 = vmatprep.subr.bf16.mxu0 0
        %1217 = vmatpush1.bf16.msra.mxu0 0
        %1218 = vmatprep.subr.bf16.mxu0 0
        %1219 = vmatpush1.bf16.msra.mxu0 0
        %1220 = vmatprep.subr.bf16.mxu0 0
        %1221 = vmatpush1.bf16.msra.mxu0 0
        %1222 = vmatprep.subr.bf16.mxu0 0
        %1223 = vmatpush1.bf16.msra.mxu0 0
        %1224 = vmatprep.subr.bf16.mxu0 0
        %1225 = vmatpush1.bf16.msra.mxu0 0
        %1226 = vmatprep.mubr.bf16.mxu0 0
        %1227 = vmatmul.mubr.bf16.gmra.mrb[0].mxu0 %v992
        %v1228 = vpop.f32.mrb[0].mxu0
        %v1229 = vadd.f32 %v1187, %v1228
        %v1230 = vpop.f32.mrb[0].mxu0
        %v1231 = vadd.f32 %v1191, %v1230
        %v1232 = vpop.f32.mrb[0].mxu0
        %v1233 = vpop.f32.mrb[0].mxu0
        %1234 = vdwg.mxu0
        %v1235 = vmax.f32 %v1229, 0.0
        %v1236 = vmax.f32 %v1231, 0.0
        %v1237 = vpack.c.bf16 %v1029, %v1029
        %v1238 = vld [vmem:[#allocation5] sm:$0xff]
        %v1239 = vld [vmem:[#allocation5 + $0x8] sm:$0xff]
        %v1240 = vld [vmem:[#allocation5 + $0x10] sm:$0xff]
        %v1241 = vld [vmem:[#allocation5 + $0x18] sm:$0xff]
        %v1242 = vld [vmem:[%s8] sm:$0x3]
        %v1247 = vunpack.c.l.b16 %v1238
        %v1248 = vunpack.c.h.b16 %v1238
        %v1249 = vunpack.c.l.b16 %v1239
        %v1250 = vunpack.c.h.b16 %v1239
        %v1251 = vunpack.c.l.b16 %v1240
        %v1252 = vunpack.c.h.b16 %v1240
        %v1253 = vunpack.c.l.b16 %v1241
        %v1254 = vunpack.c.h.b16 %v1241
        %v1255 = vpack.c.b16 %v1249, %v1247
        %v1256 = vpack.c.b16 %v1250, %v1248
        %v1257 = vpack.c.b16 %v1253, %v1251
        %v1258 = vpack.c.b16 %v1254, %v1252
        %v1264 = vlaneseq
        %v1265 = vshrl.u32 %v1264, 7
        %v1266 = vsub.s32 0, %v1265
        %v1267 = vrot.slane %v1242, %v1266
        %v1268 = vlaneseq
        %v1269 = vshrl.u32 %v1268, 7
        %v1270 = vsub.s32 1, %v1269
        %v1271 = vrot.slane %v1242, %v1270
        %v1275 = vsel %vm990, %v1237, 0
        %1277 = vmatprep.subr.bf16.mxu0 %v1256
        %1278 = vmatpush1.bf16.msra.mxu0 %v1255
        %1279 = vmatprep.subr.bf16.mxu0 %v1258
        %1280 = vmatpush1.bf16.msra.mxu0 %v1257
        %1281 = vmatprep.subr.bf16.mxu0 0
        %1282 = vmatpush1.bf16.msra.mxu0 0
        %1283 = vmatprep.subr.bf16.mxu0 0
        %1284 = vmatpush1.bf16.msra.mxu0 0
        %1285 = vmatprep.subr.bf16.mxu0 0
        %1286 = vmatpush1.bf16.msra.mxu0 0
        %1287 = vmatprep.subr.bf16.mxu0 0
        %1288 = vmatpush1.bf16.msra.mxu0 0
        %1289 = vmatprep.subr.bf16.mxu0 0
        %1290 = vmatpush1.bf16.msra.mxu0 0
        %1291 = vmatprep.subr.bf16.mxu0 0
        %1292 = vmatpush1.bf16.msra.mxu0 0
        %1293 = vmatprep.subr.bf16.mxu0 0
        %1294 = vmatpush1.bf16.msra.mxu0 0
        %1295 = vmatprep.subr.bf16.mxu0 0
        %1296 = vmatpush1.bf16.msra.mxu0 0
        %1297 = vmatprep.subr.bf16.mxu0 0
        %1298 = vmatpush1.bf16.msra.mxu0 0
        %1299 = vmatprep.subr.bf16.mxu0 0
        %1300 = vmatpush1.bf16.msra.mxu0 0
        %1301 = vmatprep.subr.bf16.mxu0 0
        %1302 = vmatpush1.bf16.msra.mxu0 0
        %1303 = vmatprep.subr.bf16.mxu0 0
        %1304 = vmatpush1.bf16.msra.mxu0 0
        %1305 = vmatprep.subr.bf16.mxu0 0
        %1306 = vmatpush1.bf16.msra.mxu0 0
        %1307 = vmatprep.subr.bf16.mxu0 0
        %1308 = vmatpush1.bf16.msra.mxu0 0
        %1309 = vmatprep.mubr.bf16.mxu0 0
        %1310 = vmatmul.mubr.bf16.gmra.mrb[0].mxu0 %v1275
        %v1311 = vpop.f32.mrb[0].mxu0
        %v1312 = vadd.f32 %v1267, %v1311
        %v1313 = vpop.f32.mrb[0].mxu0
        %v1314 = vadd.f32 %v1271, %v1313
        %v1315 = vpop.f32.mrb[0].mxu0
        %v1316 = vpop.f32.mrb[0].mxu0
        %1317 = vdwg.mxu0
        %v1318 = vmax.f32 %v1312, 0.0
        %v1319 = vmax.f32 %v1314, 0.0
        %v1320 = vpack.c.bf16 %v1235, %v1235
        %v1321 = vpack.c.bf16 %v1236, %v1236
        %v1322 = vld [vmem:[%s9] sm:$0xff]
        %v1323 = vld [vmem:[%s9 + $0x8] sm:$0xff]
        %v1324 = vld [vmem:[%s9 + $0x10] sm:$0xff]
        %v1325 = vld [vmem:[%s9 + $0x18] sm:$0xff]
        %v1326 = vld [vmem:[%s9 + $0x20] sm:$0xff]
        %v1327 = vld [vmem:[%s9 + $0x28] sm:$0xff]
        %v1328 = vld [vmem:[%s9 + $0x30] sm:$0xff]
        %v1329 = vld [vmem:[%s9 + $0x38] sm:$0xff]
        %v1330 = vld [vmem:[%s9 + $0x40] sm:$0xff]
        %v1331 = vld [vmem:[%s9 + $0x48] sm:$0xff]
        %v1332 = vld [vmem:[%s9 + $0x50] sm:$0xff]
        %v1333 = vld [vmem:[%s9 + $0x58] sm:$0xff]
        %v1334 = vld [vmem:[%s9 + $0x60] sm:$0xff]
        %v1335 = vld [vmem:[%s9 + $0x68] sm:$0xff]
        %v1336 = vld [vmem:[%s9 + $0x70] sm:$0xff]
        %v1337 = vld [vmem:[%s9 + $0x78] sm:$0xff]
        %v1338 = vld [vmem:[%s9 + $0x80] sm:$0xff]
        %v1339 = vld [vmem:[%s9 + $0x88] sm:$0xff]
        %v1340 = vld [vmem:[%s9 + $0x90] sm:$0xff]
        %v1341 = vld [vmem:[%s9 + $0x98] sm:$0xff]
        %v1342 = vld [vmem:[%s9 + $0xa0] sm:$0xff]
        %v1343 = vld [vmem:[%s9 + $0xa8] sm:$0xff]
        %v1344 = vld [vmem:[%s9 + $0xb0] sm:$0xff]
        %v1345 = vld [vmem:[%s9 + $0xb8] sm:$0xff]
        %v1346 = vld [vmem:[%s9 + $0xc0] sm:$0xff]
        %v1347 = vld [vmem:[%s9 + $0xc8] sm:$0xff]
        %v1348 = vld [vmem:[%s9 + $0xd0] sm:$0xff]
        %v1349 = vld [vmem:[%s9 + $0xd8] sm:$0xff]
        %v1350 = vld [vmem:[%s9 + $0xe0] sm:$0xff]
        %v1351 = vld [vmem:[%s9 + $0xe8] sm:$0xff]
        %v1352 = vld [vmem:[%s9 + $0xf0] sm:$0xff]
        %v1353 = vld [vmem:[%s9 + $0xf8] sm:$0xff]
        %v1354 = vpack.c.bf16 %v1318, %v1318
        %v1355 = vpack.c.bf16 %v1319, %v1319
        %v1356 = vld [vmem:[%s10] sm:$0xff]
        %v1357 = vld [vmem:[%s10 + $0x8] sm:$0xff]
        %v1358 = vld [vmem:[%s10 + $0x10] sm:$0xff]
        %v1359 = vld [vmem:[%s10 + $0x18] sm:$0xff]
        %v1360 = vld [vmem:[%s10 + $0x20] sm:$0xff]
        %v1361 = vld [vmem:[%s10 + $0x28] sm:$0xff]
        %v1362 = vld [vmem:[%s10 + $0x30] sm:$0xff]
        %v1363 = vld [vmem:[%s10 + $0x38] sm:$0xff]
        %v1364 = vld [vmem:[%s10 + $0x40] sm:$0xff]
        %v1365 = vld [vmem:[%s10 + $0x48] sm:$0xff]
        %v1366 = vld [vmem:[%s10 + $0x50] sm:$0xff]
        %v1367 = vld [vmem:[%s10 + $0x58] sm:$0xff]
        %v1368 = vld [vmem:[%s10 + $0x60] sm:$0xff]
        %v1369 = vld [vmem:[%s10 + $0x68] sm:$0xff]
        %v1370 = vld [vmem:[%s10 + $0x70] sm:$0xff]
        %v1371 = vld [vmem:[%s10 + $0x78] sm:$0xff]
        %v1372 = vld [vmem:[%s10 + $0x80] sm:$0xff]
        %v1373 = vld [vmem:[%s10 + $0x88] sm:$0xff]
        %v1374 = vld [vmem:[%s10 + $0x90] sm:$0xff]
        %v1375 = vld [vmem:[%s10 + $0x98] sm:$0xff]
        %v1376 = vld [vmem:[%s10 + $0xa0] sm:$0xff]
        %v1377 = vld [vmem:[%s10 + $0xa8] sm:$0xff]
        %v1378 = vld [vmem:[%s10 + $0xb0] sm:$0xff]
        %v1379 = vld [vmem:[%s10 + $0xb8] sm:$0xff]
        %v1380 = vld [vmem:[%s10 + $0xc0] sm:$0xff]
        %v1381 = vld [vmem:[%s10 + $0xc8] sm:$0xff]
        %v1382 = vld [vmem:[%s10 + $0xd0] sm:$0xff]
        %v1383 = vld [vmem:[%s10 + $0xd8] sm:$0xff]
        %v1384 = vld [vmem:[%s10 + $0xe0] sm:$0xff]
        %v1385 = vld [vmem:[%s10 + $0xe8] sm:$0xff]
        %v1386 = vld [vmem:[%s10 + $0xf0] sm:$0xff]
        %v1387 = vld [vmem:[%s10 + $0xf8] sm:$0xff]
        %v1420 = vunpack.c.l.b16 %v1356
        %v1421 = vunpack.c.h.b16 %v1356
        %v1422 = vunpack.c.l.b16 %v1357
        %v1423 = vunpack.c.h.b16 %v1357
        %v1424 = vunpack.c.l.b16 %v1358
        %v1425 = vunpack.c.h.b16 %v1358
        %v1426 = vunpack.c.l.b16 %v1359
        %v1427 = vunpack.c.h.b16 %v1359
        %v1428 = vunpack.c.l.b16 %v1360
        %v1429 = vunpack.c.h.b16 %v1360
        %v1430 = vunpack.c.l.b16 %v1361
        %v1431 = vunpack.c.h.b16 %v1361
        %v1432 = vunpack.c.l.b16 %v1362
        %v1433 = vunpack.c.h.b16 %v1362
        %v1434 = vunpack.c.l.b16 %v1363
        %v1435 = vunpack.c.h.b16 %v1363
        %v1436 = vunpack.c.l.b16 %v1364
        %v1437 = vunpack.c.h.b16 %v1364
        %v1438 = vunpack.c.l.b16 %v1365
        %v1439 = vunpack.c.h.b16 %v1365
        %v1440 = vunpack.c.l.b16 %v1366
        %v1441 = vunpack.c.h.b16 %v1366
        %v1442 = vunpack.c.l.b16 %v1367
        %v1443 = vunpack.c.h.b16 %v1367
        %v1444 = vunpack.c.l.b16 %v1368
        %v1445 = vunpack.c.h.b16 %v1368
        %v1446 = vunpack.c.l.b16 %v1369
        %v1447 = vunpack.c.h.b16 %v1369
        %v1448 = vunpack.c.l.b16 %v1370
        %v1449 = vunpack.c.h.b16 %v1370
        %v1450 = vunpack.c.l.b16 %v1371
        %v1451 = vunpack.c.h.b16 %v1371
        %v1452 = vunpack.c.l.b16 %v1372
        %v1453 = vunpack.c.h.b16 %v1372
        %v1454 = vunpack.c.l.b16 %v1373
        %v1455 = vunpack.c.h.b16 %v1373
        %v1456 = vunpack.c.l.b16 %v1374
        %v1457 = vunpack.c.h.b16 %v1374
        %v1458 = vunpack.c.l.b16 %v1375
        %v1459 = vunpack.c.h.b16 %v1375
        %v1460 = vunpack.c.l.b16 %v1376
        %v1461 = vunpack.c.h.b16 %v1376
        %v1462 = vunpack.c.l.b16 %v1377
        %v1463 = vunpack.c.h.b16 %v1377
        %v1464 = vunpack.c.l.b16 %v1378
        %v1465 = vunpack.c.h.b16 %v1378
        %v1466 = vunpack.c.l.b16 %v1379
        %v1467 = vunpack.c.h.b16 %v1379
        %v1468 = vunpack.c.l.b16 %v1380
        %v1469 = vunpack.c.h.b16 %v1380
        %v1470 = vunpack.c.l.b16 %v1381
        %v1471 = vunpack.c.h.b16 %v1381
        %v1472 = vunpack.c.l.b16 %v1382
        %v1473 = vunpack.c.h.b16 %v1382
        %v1474 = vunpack.c.l.b16 %v1383
        %v1475 = vunpack.c.h.b16 %v1383
        %v1476 = vunpack.c.l.b16 %v1384
        %v1477 = vunpack.c.h.b16 %v1384
        %v1478 = vunpack.c.l.b16 %v1385
        %v1479 = vunpack.c.h.b16 %v1385
        %v1480 = vunpack.c.l.b16 %v1386
        %v1481 = vunpack.c.h.b16 %v1386
        %v1482 = vunpack.c.l.b16 %v1387
        %v1483 = vunpack.c.h.b16 %v1387
        %v1484 = vpack.c.b16 %v1422, %v1420
        %v1485 = vpack.c.b16 %v1423, %v1421
        %v1486 = vpack.c.b16 %v1426, %v1424
        %v1487 = vpack.c.b16 %v1427, %v1425
        %v1488 = vpack.c.b16 %v1430, %v1428
        %v1489 = vpack.c.b16 %v1431, %v1429
        %v1490 = vpack.c.b16 %v1434, %v1432
        %v1491 = vpack.c.b16 %v1435, %v1433
        %v1492 = vpack.c.b16 %v1438, %v1436
        %v1493 = vpack.c.b16 %v1439, %v1437
        %v1494 = vpack.c.b16 %v1442, %v1440
        %v1495 = vpack.c.b16 %v1443, %v1441
        %v1496 = vpack.c.b16 %v1446, %v1444
        %v1497 = vpack.c.b16 %v1447, %v1445
        %v1498 = vpack.c.b16 %v1450, %v1448
        %v1499 = vpack.c.b16 %v1451, %v1449
        %v1500 = vpack.c.b16 %v1454, %v1452
        %v1501 = vpack.c.b16 %v1455, %v1453
        %v1502 = vpack.c.b16 %v1458, %v1456
        %v1503 = vpack.c.b16 %v1459, %v1457
        %v1504 = vpack.c.b16 %v1462, %v1460
        %v1505 = vpack.c.b16 %v1463, %v1461
        %v1506 = vpack.c.b16 %v1466, %v1464
        %v1507 = vpack.c.b16 %v1467, %v1465
        %v1508 = vpack.c.b16 %v1470, %v1468
        %v1509 = vpack.c.b16 %v1471, %v1469
        %v1510 = vpack.c.b16 %v1474, %v1472
        %v1511 = vpack.c.b16 %v1475, %v1473
        %v1512 = vpack.c.b16 %v1478, %v1476
        %v1513 = vpack.c.b16 %v1479, %v1477
        %v1514 = vpack.c.b16 %v1482, %v1480
        %v1515 = vpack.c.b16 %v1483, %v1481
        %1548 = vmatprep.subr.bf16.mxu0 %v1485
        %1549 = vmatpush1.bf16.msra.mxu0 %v1484
        %1550 = vmatprep.subr.bf16.mxu0 %v1487
        %1551 = vmatpush1.bf16.msra.mxu0 %v1486
        %1552 = vmatprep.subr.bf16.mxu0 %v1489
        %1553 = vmatpush1.bf16.msra.mxu0 %v1488
        %1554 = vmatprep.subr.bf16.mxu0 %v1491
        %1555 = vmatpush1.bf16.msra.mxu0 %v1490
        %1556 = vmatprep.subr.bf16.mxu0 %v1493
        %1557 = vmatpush1.bf16.msra.mxu0 %v1492
        %1558 = vmatprep.subr.bf16.mxu0 %v1495
        %1559 = vmatpush1.bf16.msra.mxu0 %v1494
        %1560 = vmatprep.subr.bf16.mxu0 %v1497
        %1561 = vmatpush1.bf16.msra.mxu0 %v1496
        %1562 = vmatprep.subr.bf16.mxu0 %v1499
        %1563 = vmatpush1.bf16.msra.mxu0 %v1498
        %1564 = vmatprep.subr.bf16.mxu0 %v1501
        %1565 = vmatpush1.bf16.msra.mxu0 %v1500
        %1566 = vmatprep.subr.bf16.mxu0 %v1503
        %1567 = vmatpush1.bf16.msra.mxu0 %v1502
        %1568 = vmatprep.subr.bf16.mxu0 %v1505
        %1569 = vmatpush1.bf16.msra.mxu0 %v1504
        %1570 = vmatprep.subr.bf16.mxu0 %v1507
        %1571 = vmatpush1.bf16.msra.mxu0 %v1506
        %1572 = vmatprep.subr.bf16.mxu0 %v1509
        %1573 = vmatpush1.bf16.msra.mxu0 %v1508
        %1574 = vmatprep.subr.bf16.mxu0 %v1511
        %1575 = vmatpush1.bf16.msra.mxu0 %v1510
        %1576 = vmatprep.subr.bf16.mxu0 %v1513
        %1577 = vmatpush1.bf16.msra.mxu0 %v1512
        %1578 = vmatprep.subr.bf16.mxu0 %v1515
        %1579 = vmatpush1.bf16.msra.mxu0 %v1514
        %1580 = vmatprep.mubr.bf16.mxu0 %v1355
        %1581 = vmatmul.mubr.bf16.gmra.mrb[0].mxu0 %v1354
        %v1582 = vpop.f32.mrb[0].mxu0
        %v1583 = vadd.f32 0.0, %v1582
        %v1584 = vpop.f32.mrb[0].mxu0
        %v1585 = vadd.f32 0.0, %v1584
        %v1586 = vpop.f32.mrb[0].mxu0
        %v1587 = vpop.f32.mrb[0].mxu0
        %1588 = vdwg.mxu0
        %v1621 = vunpack.c.l.b16 %v1322
        %v1622 = vunpack.c.h.b16 %v1322
        %v1623 = vunpack.c.l.b16 %v1323
        %v1624 = vunpack.c.h.b16 %v1323
        %v1625 = vunpack.c.l.b16 %v1324
        %v1626 = vunpack.c.h.b16 %v1324
        %v1627 = vunpack.c.l.b16 %v1325
        %v1628 = vunpack.c.h.b16 %v1325
        %v1629 = vunpack.c.l.b16 %v1326
        %v1630 = vunpack.c.h.b16 %v1326
        %v1631 = vunpack.c.l.b16 %v1327
        %v1632 = vunpack.c.h.b16 %v1327
        %v1633 = vunpack.c.l.b16 %v1328
        %v1634 = vunpack.c.h.b16 %v1328
        %v1635 = vunpack.c.l.b16 %v1329
        %v1636 = vunpack.c.h.b16 %v1329
        %v1637 = vunpack.c.l.b16 %v1330
        %v1638 = vunpack.c.h.b16 %v1330
        %v1639 = vunpack.c.l.b16 %v1331
        %v1640 = vunpack.c.h.b16 %v1331
        %v1641 = vunpack.c.l.b16 %v1332
        %v1642 = vunpack.c.h.b16 %v1332
        %v1643 = vunpack.c.l.b16 %v1333
        %v1644 = vunpack.c.h.b16 %v1333
        %v1645 = vunpack.c.l.b16 %v1334
        %v1646 = vunpack.c.h.b16 %v1334
        %v1647 = vunpack.c.l.b16 %v1335
        %v1648 = vunpack.c.h.b16 %v1335
        %v1649 = vunpack.c.l.b16 %v1336
        %v1650 = vunpack.c.h.b16 %v1336
        %v1651 = vunpack.c.l.b16 %v1337
        %v1652 = vunpack.c.h.b16 %v1337
        %v1653 = vunpack.c.l.b16 %v1338
        %v1654 = vunpack.c.h.b16 %v1338
        %v1655 = vunpack.c.l.b16 %v1339
        %v1656 = vunpack.c.h.b16 %v1339
        %v1657 = vunpack.c.l.b16 %v1340
        %v1658 = vunpack.c.h.b16 %v1340
        %v1659 = vunpack.c.l.b16 %v1341
        %v1660 = vunpack.c.h.b16 %v1341
        %v1661 = vunpack.c.l.b16 %v1342
        %v1662 = vunpack.c.h.b16 %v1342
        %v1663 = vunpack.c.l.b16 %v1343
        %v1664 = vunpack.c.h.b16 %v1343
        %v1665 = vunpack.c.l.b16 %v1344
        %v1666 = vunpack.c.h.b16 %v1344
        %v1667 = vunpack.c.l.b16 %v1345
        %v1668 = vunpack.c.h.b16 %v1345
        %v1669 = vunpack.c.l.b16 %v1346
        %v1670 = vunpack.c.h.b16 %v1346
        %v1671 = vunpack.c.l.b16 %v1347
        %v1672 = vunpack.c.h.b16 %v1347
        %v1673 = vunpack.c.l.b16 %v1348
        %v1674 = vunpack.c.h.b16 %v1348
        %v1675 = vunpack.c.l.b16 %v1349
        %v1676 = vunpack.c.h.b16 %v1349
        %v1677 = vunpack.c.l.b16 %v1350
        %v1678 = vunpack.c.h.b16 %v1350
        %v1679 = vunpack.c.l.b16 %v1351
        %v1680 = vunpack.c.h.b16 %v1351
        %v1681 = vunpack.c.l.b16 %v1352
        %v1682 = vunpack.c.h.b16 %v1352
        %v1683 = vunpack.c.l.b16 %v1353
        %v1684 = vunpack.c.h.b16 %v1353
        %v1685 = vpack.c.b16 %v1623, %v1621
        %v1686 = vpack.c.b16 %v1624, %v1622
        %v1687 = vpack.c.b16 %v1627, %v1625
        %v1688 = vpack.c.b16 %v1628, %v1626
        %v1689 = vpack.c.b16 %v1631, %v1629
        %v1690 = vpack.c.b16 %v1632, %v1630
        %v1691 = vpack.c.b16 %v1635, %v1633
        %v1692 = vpack.c.b16 %v1636, %v1634
        %v1693 = vpack.c.b16 %v1639, %v1637
        %v1694 = vpack.c.b16 %v1640, %v1638
        %v1695 = vpack.c.b16 %v1643, %v1641
        %v1696 = vpack.c.b16 %v1644, %v1642
        %v1697 = vpack.c.b16 %v1647, %v1645
        %v1698 = vpack.c.b16 %v1648, %v1646
        %v1699 = vpack.c.b16 %v1651, %v1649
        %v1700 = vpack.c.b16 %v1652, %v1650
        %v1701 = vpack.c.b16 %v1655, %v1653
        %v1702 = vpack.c.b16 %v1656, %v1654
        %v1703 = vpack.c.b16 %v1659, %v1657
        %v1704 = vpack.c.b16 %v1660, %v1658
        %v1705 = vpack.c.b16 %v1663, %v1661
        %v1706 = vpack.c.b16 %v1664, %v1662
        %v1707 = vpack.c.b16 %v1667, %v1665
        %v1708 = vpack.c.b16 %v1668, %v1666
        %v1709 = vpack.c.b16 %v1671, %v1669
        %v1710 = vpack.c.b16 %v1672, %v1670
        %v1711 = vpack.c.b16 %v1675, %v1673
        %v1712 = vpack.c.b16 %v1676, %v1674
        %v1713 = vpack.c.b16 %v1679, %v1677
        %v1714 = vpack.c.b16 %v1680, %v1678
        %v1715 = vpack.c.b16 %v1683, %v1681
        %v1716 = vpack.c.b16 %v1684, %v1682
        %1749 = vmatprep.subr.bf16.mxu0 %v1686
        %1750 = vmatpush1.bf16.msra.mxu0 %v1685
        %1751 = vmatprep.subr.bf16.mxu0 %v1688
        %1752 = vmatpush1.bf16.msra.mxu0 %v1687
        %1753 = vmatprep.subr.bf16.mxu0 %v1690
        %1754 = vmatpush1.bf16.msra.mxu0 %v1689
        %1755 = vmatprep.subr.bf16.mxu0 %v1692
        %1756 = vmatpush1.bf16.msra.mxu0 %v1691
        %1757 = vmatprep.subr.bf16.mxu0 %v1694
        %1758 = vmatpush1.bf16.msra.mxu0 %v1693
        %1759 = vmatprep.subr.bf16.mxu0 %v1696
        %1760 = vmatpush1.bf16.msra.mxu0 %v1695
        %1761 = vmatprep.subr.bf16.mxu0 %v1698
        %1762 = vmatpush1.bf16.msra.mxu0 %v1697
        %1763 = vmatprep.subr.bf16.mxu0 %v1700
        %1764 = vmatpush1.bf16.msra.mxu0 %v1699
        %1765 = vmatprep.subr.bf16.mxu0 %v1702
        %1766 = vmatpush1.bf16.msra.mxu0 %v1701
        %1767 = vmatprep.subr.bf16.mxu0 %v1704
        %1768 = vmatpush1.bf16.msra.mxu0 %v1703
        %1769 = vmatprep.subr.bf16.mxu0 %v1706
        %1770 = vmatpush1.bf16.msra.mxu0 %v1705
        %1771 = vmatprep.subr.bf16.mxu0 %v1708
        %1772 = vmatpush1.bf16.msra.mxu0 %v1707
        %1773 = vmatprep.subr.bf16.mxu0 %v1710
        %1774 = vmatpush1.bf16.msra.mxu0 %v1709
        %1775 = vmatprep.subr.bf16.mxu0 %v1712
        %1776 = vmatpush1.bf16.msra.mxu0 %v1711
        %1777 = vmatprep.subr.bf16.mxu0 %v1714
        %1778 = vmatpush1.bf16.msra.mxu0 %v1713
        %1779 = vmatprep.subr.bf16.mxu0 %v1716
        %1780 = vmatpush1.bf16.msra.mxu0 %v1715
        %1781 = vmatprep.mubr.bf16.mxu0 %v1321
        %1782 = vmatmul.mubr.bf16.gmra.mrb[0].mxu0 %v1320
        %v1783 = vpop.f32.mrb[0].mxu0
        %v1784 = vadd.f32 %v1583, %v1783
        %v1785 = vpop.f32.mrb[0].mxu0
        %v1786 = vadd.f32 %v1585, %v1785
        %v1787 = vpop.f32.mrb[0].mxu0
        %v1788 = vpop.f32.mrb[0].mxu0
        %1789 = vdwg.mxu0
        %v1790 = vld [vmem:[%s11] sm:$0x3]
        %v1792 = vlaneseq
        %v1793 = vshrl.u32 %v1792, 7
        %v1794 = vsub.s32 0, %v1793
        %v1795 = vrot.slane %v1790, %v1794
        %v1796 = vlaneseq
        %v1797 = vshrl.u32 %v1796, 7
        %v1798 = vsub.s32 1, %v1797
        %v1799 = vrot.slane %v1790, %v1798
        %v1802 = vadd.f32 %v1784, %v1795
        %v1803 = vadd.f32 %v1786, %v1799
        %v1804 = vmax.f32 %v1802, 0.0
        %v1805 = vmax.f32 %v1803, 0.0
        %v1806 = vpack.c.bf16 %v1804, %v1804
        %v1807 = vpack.c.bf16 %v1805, %v1805
        %v1808 = vld [vmem:[#allocation7] sm:$0xf]
        %v1809 = vld [vmem:[#allocation7 + $0x4] sm:$0xf]
        %v1810 = vld [vmem:[#allocation7 + $0x8] sm:$0xf]
        %v1811 = vld [vmem:[#allocation7 + $0xc] sm:$0xf]
        %v1812 = vld [vmem:[#allocation7 + $0x10] sm:$0xf]
        %v1813 = vld [vmem:[#allocation7 + $0x14] sm:$0xf]
        %v1814 = vld [vmem:[#allocation7 + $0x18] sm:$0xf]
        %v1815 = vld [vmem:[#allocation7 + $0x1c] sm:$0xf]
        %v1816 = vld [vmem:[#allocation7 + $0x20] sm:$0xf]
        %v1817 = vld [vmem:[#allocation7 + $0x24] sm:$0xf]
        %v1818 = vld [vmem:[#allocation7 + $0x28] sm:$0xf]
        %v1819 = vld [vmem:[#allocation7 + $0x2c] sm:$0xf]
        %v1820 = vld [vmem:[#allocation7 + $0x30] sm:$0xf]
        %v1821 = vld [vmem:[#allocation7 + $0x34] sm:$0xf]
        %v1822 = vld [vmem:[#allocation7 + $0x38] sm:$0xf]
        %v1823 = vld [vmem:[#allocation7 + $0x3c] sm:$0xf]
        %v1824 = vld [vmem:[#allocation7 + $0x40] sm:$0xf]
        %v1825 = vld [vmem:[#allocation7 + $0x44] sm:$0xf]
        %v1826 = vld [vmem:[#allocation7 + $0x48] sm:$0xf]
        %v1827 = vld [vmem:[#allocation7 + $0x4c] sm:$0xf]
        %v1828 = vld [vmem:[#allocation7 + $0x50] sm:$0xf]
        %v1829 = vld [vmem:[#allocation7 + $0x54] sm:$0xf]
        %v1830 = vld [vmem:[#allocation7 + $0x58] sm:$0xf]
        %v1831 = vld [vmem:[#allocation7 + $0x5c] sm:$0xf]
        %v1832 = vld [vmem:[#allocation7 + $0x60] sm:$0xf]
        %v1833 = vld [vmem:[#allocation7 + $0x64] sm:$0xf]
        %v1834 = vld [vmem:[#allocation7 + $0x68] sm:$0xf]
        %v1835 = vld [vmem:[#allocation7 + $0x6c] sm:$0xf]
        %v1836 = vld [vmem:[#allocation7 + $0x70] sm:$0xf]
        %v1837 = vld [vmem:[#allocation7 + $0x74] sm:$0xf]
        %v1838 = vld [vmem:[#allocation7 + $0x78] sm:$0xf]
        %v1839 = vld [vmem:[#allocation7 + $0x7c] sm:$0xf]
        %v1840 = vld [vmem:[%s13] sm:$0x1]
        %v1873 = vunpack.c.l.b16 %v1808
        %v1874 = vunpack.c.l.b16 %v1809
        %v1875 = vunpack.c.l.b16 %v1810
        %v1876 = vunpack.c.l.b16 %v1811
        %v1877 = vunpack.c.l.b16 %v1812
        %v1878 = vunpack.c.l.b16 %v1813
        %v1879 = vunpack.c.l.b16 %v1814
        %v1880 = vunpack.c.l.b16 %v1815
        %v1881 = vunpack.c.l.b16 %v1816
        %v1882 = vunpack.c.l.b16 %v1817
        %v1883 = vunpack.c.l.b16 %v1818
        %v1884 = vunpack.c.l.b16 %v1819
        %v1885 = vunpack.c.l.b16 %v1820
        %v1886 = vunpack.c.l.b16 %v1821
        %v1887 = vunpack.c.l.b16 %v1822
        %v1888 = vunpack.c.l.b16 %v1823
        %v1889 = vunpack.c.l.b16 %v1824
        %v1890 = vunpack.c.l.b16 %v1825
        %v1891 = vunpack.c.l.b16 %v1826
        %v1892 = vunpack.c.l.b16 %v1827
        %v1893 = vunpack.c.l.b16 %v1828
        %v1894 = vunpack.c.l.b16 %v1829
        %v1895 = vunpack.c.l.b16 %v1830
        %v1896 = vunpack.c.l.b16 %v1831
        %v1897 = vunpack.c.l.b16 %v1832
        %v1898 = vunpack.c.l.b16 %v1833
        %v1899 = vunpack.c.l.b16 %v1834
        %v1900 = vunpack.c.l.b16 %v1835
        %v1901 = vunpack.c.l.b16 %v1836
        %v1902 = vunpack.c.l.b16 %v1837
        %v1903 = vunpack.c.l.b16 %v1838
        %v1904 = vunpack.c.l.b16 %v1839
        %v1905 = vpack.c.b16 %v1874, %v1873
        %v1906 = vpack.c.b16 %v1876, %v1875
        %v1907 = vpack.c.b16 %v1878, %v1877
        %v1908 = vpack.c.b16 %v1880, %v1879
        %v1909 = vpack.c.b16 %v1882, %v1881
        %v1910 = vpack.c.b16 %v1884, %v1883
        %v1911 = vpack.c.b16 %v1886, %v1885
        %v1912 = vpack.c.b16 %v1888, %v1887
        %v1913 = vpack.c.b16 %v1890, %v1889
        %v1914 = vpack.c.b16 %v1892, %v1891
        %v1915 = vpack.c.b16 %v1894, %v1893
        %v1916 = vpack.c.b16 %v1896, %v1895
        %v1917 = vpack.c.b16 %v1898, %v1897
        %v1918 = vpack.c.b16 %v1900, %v1899
        %v1919 = vpack.c.b16 %v1902, %v1901
        %v1920 = vpack.c.b16 %v1904, %v1903
        %1937 = vmatprep.subr.bf16.mxu0 0
        %1938 = vmatpush1.bf16.msra.mxu0 %v1905
        %1939 = vmatprep.subr.bf16.mxu0 0
        %1940 = vmatpush1.bf16.msra.mxu0 %v1906
        %1941 = vmatprep.subr.bf16.mxu0 0
        %1942 = vmatpush1.bf16.msra.mxu0 %v1907
        %1943 = vmatprep.subr.bf16.mxu0 0
        %1944 = vmatpush1.bf16.msra.mxu0 %v1908
        %1945 = vmatprep.subr.bf16.mxu0 0
        %1946 = vmatpush1.bf16.msra.mxu0 %v1909
        %1947 = vmatprep.subr.bf16.mxu0 0
        %1948 = vmatpush1.bf16.msra.mxu0 %v1910
        %1949 = vmatprep.subr.bf16.mxu0 0
        %1950 = vmatpush1.bf16.msra.mxu0 %v1911
        %1951 = vmatprep.subr.bf16.mxu0 0
        %1952 = vmatpush1.bf16.msra.mxu0 %v1912
        %1953 = vmatprep.subr.bf16.mxu0 0
        %1954 = vmatpush1.bf16.msra.mxu0 %v1913
        %1955 = vmatprep.subr.bf16.mxu0 0
        %1956 = vmatpush1.bf16.msra.mxu0 %v1914
        %1957 = vmatprep.subr.bf16.mxu0 0
        %1958 = vmatpush1.bf16.msra.mxu0 %v1915
        %1959 = vmatprep.subr.bf16.mxu0 0
        %1960 = vmatpush1.bf16.msra.mxu0 %v1916
        %1961 = vmatprep.subr.bf16.mxu0 0
        %1962 = vmatpush1.bf16.msra.mxu0 %v1917
        %1963 = vmatprep.subr.bf16.mxu0 0
        %1964 = vmatpush1.bf16.msra.mxu0 %v1918
        %1965 = vmatprep.subr.bf16.mxu0 0
        %1966 = vmatpush1.bf16.msra.mxu0 %v1919
        %1967 = vmatprep.subr.bf16.mxu0 0
        %1968 = vmatpush1.bf16.msra.mxu0 %v1920
        %1969 = vmatprep.mubr.bf16.mxu0 %v1807
        %1970 = vmatmul.mubr.bf16.gmra.mrb[0].mxu0 %v1806
        %v1971 = vpop.f32.mrb[0].mxu0
        %v1972 = vadd.f32 %v1840, %v1971
        %v1973 = vpop.f32.mrb[0].mxu0
        %v1974 = vpop.f32.mrb[0].mxu0
        %v1975 = vpop.f32.mrb[0].mxu0
        %1976 = vdwg.mxu0
        %1977 = vst [vmem:[%s531] sm:$0x1] %v1972
        %s1978 = sand.u32 %s339, 1
        %s1979 = scalar_lea.sflag [#allocation4], %s1978
        %s1980 = sand.u32 %s339, 1
        %s1981 = scalar_lea.vmem [#allocation8], %s1980
        %p1982 = scmp.lt.s32.totalorder %s32, 1
        %s1983 = scalar_select %p1982, %s32, 1
        %s1984 = smul.addr %s1983, 2
        %s1985 = smul.addr %s1984, 2
        %s1986 = scalar_lea.vmem %s15, %s1985
        // Predicated region
        $region89: #{image_encoder_classification_forward.1} parent=75 // pred_check
          %p1987 = pneg %p349
        $region90: #{image_encoder_classification_forward.1} parent=75 // pred_check_branch
          %1989 = sbr.rel (%p1987) target = $region92
        $region91: #{image_encoder_classification_forward.1} parent=75 // pred_region
          %s1991 = ssub.s32 16, 16
          %1992 = vsyncadd %s1979, %s1991
          %s1993 = smul.addr %s32, 16
          %s1994 = scalar_lea.hbm %s14, %s1993
          %s1996 = sshll.u32 %s1981, 4
          %s1997 = int_to_ptr.vmem [resolvable:$true] %s1996
          %1999 = dma.vmem_to_hbm [thread:$0]  %s1997, 16, %s1994, %s1979
        $region92: #{image_encoder_classification_forward.1} parent=75 // pred_fallthru
          _
        // Predicated region
        $region93: #{image_encoder_classification_forward.1} parent=75 // pred_check
          %p2000 = pneg %p375
        $region94: #{image_encoder_classification_forward.1} parent=75 // pred_check_branch
          %2002 = sbr.rel (%p2000) target = $region96
        $region95: #{image_encoder_classification_forward.1} parent=75 // pred_region
          _
        $region96: #{image_encoder_classification_forward.1} parent=75 // pred_fallthru
          _
      $region76: #{image_encoder_classification_forward.1} parent=5 // pred_fallthru
        _
      %p2003 = scmp.le.s32.totalorder 2, %s27
      // Predicated region
      $region97: #{image_encoder_classification_forward.1} parent=5 // pred_check
        %p2004 = pneg %p2003
      $region98: #{image_encoder_classification_forward.1} parent=5 // pred_check_branch
        %2006 = sbr.rel (%p2004) target = $region100
      $region99: #{image_encoder_classification_forward.1} parent=5 // pred_region
        %s2007 = ssub.s32 %s27, 2
        // Predicated region
        $region101: #{image_encoder_classification_forward.1} parent=99 // pred_check
          %p2008 = pneg %p355
        $region102: #{image_encoder_classification_forward.1} parent=99 // pred_check_branch
          %2010 = sbr.rel (%p2008) target = $region104
        $region103: #{image_encoder_classification_forward.1} parent=99 // pred_region
          %s2011 = sand.u32 %s340, 1
          %s2012 = scalar_lea.sflag [#allocation4], %s2011
          %s2013 = sand.u32 %s340, 1
          %s2014 = scalar_lea.vmem [#allocation8], %s2013
          %2015 = dma.done %s2012, 16
        $region104: #{image_encoder_classification_forward.1} parent=99 // pred_fallthru
          _
        // Predicated region
        $region105: #{image_encoder_classification_forward.1} parent=99 // pred_check
          %p2016 = pneg %p381
        $region106: #{image_encoder_classification_forward.1} parent=99 // pred_check_branch
          %2018 = sbr.rel (%p2016) target = $region108
        $region107: #{image_encoder_classification_forward.1} parent=99 // pred_region
          %p2019 = scmp.lt.s32.totalorder %s33, 1
          %s2020 = scalar_select %p2019, %s33, 1
          %s2021 = smul.addr %s2020, 2
          %s2022 = smul.addr %s2021, 2
          %s2023 = scalar_lea.vmem %s15, %s2022
        $region108: #{image_encoder_classification_forward.1} parent=99 // pred_fallthru
          _
      $region100: #{image_encoder_classification_forward.1} parent=5 // pred_fallthru
        _
    $region6: #{image_encoder_classification_forward.1} parent=1 // loop_footer
      %s31 = sadd.s32 1, %s27
    $region7: #{image_encoder_classification_forward.1} parent=1 // loop_footer_branch
      %26 = sbr.rel target = $region3
    $region8: #{image_encoder_classification_forward.1} parent=1 // loop_exit
      _
    %2024 = vsyncpa [#allocation3], 1
    %s2025 = scalar_lea.sflag [#allocation3], 1
    %2026 = vsyncpa %s2025, 1
    %2027 = vsyncpa [#allocation6], 1
    %2028 = vsyncpa [#allocation4], 1
    %s2029 = scalar_lea.sflag [#allocation4], 1
    %2030 = vsyncpa %s2029, 1

</llo_original>
